<compile_context>
chip_gen: v7x
topology: tpu7x:2x2x1
jax: 0.10.0
libtpu: 0.0.40
codegen_flags: <defaults>
</compile_context>

<pallas_src>
import functools

import jax
import jax.numpy as jnp
import numpy as np
from jax.experimental import pallas as pl
from jax.experimental.pallas import tpu as pltpu

# ----------------------------- config (small) -------------------------------
BATCH = 2
SEQ = 8
HIDDEN = 128
N_HEADS = 4
N_KV_HEADS = 2
HEAD_DIM = HIDDEN // N_HEADS           # 32
N_REP = N_HEADS // N_KV_HEADS          # 2
INTERMEDIATE = 256
RMS_EPS = 1e-6
ROPE_BASE = 10000.0
SCALING = HEAD_DIM ** -0.5
DTYPE = jnp.float32
WEIGHT_DTYPE = jnp.bfloat16            # MXU operand dtype for all projections


# ------------------------------ fused kernel --------------------------------
def _decoder_layer_kernel(x_ref, wqkv_ref, cos_ref, sin_ref, mask_ref,
                          wo_ref, wgu_ref, wd_ref, o_ref, *,
                          eps, n_heads, head_dim):
    R, H = x_ref.shape                       # R = B*S rows, H = hidden
    x = x_ref[...].astype(jnp.float32)       # (R, H)

    # ---- RMSNorm #1 (gamma folded into wqkv columns at prep time) ----
    var = jnp.mean(x * x, axis=-1, keepdims=True)
    normed = (x * jax.lax.rsqrt(var + eps)).astype(WEIGHT_DTYPE)

    # ---- fused QKV projection (repeat_kv + gamma1 + attn scale pre-folded) --
    qkv = jnp.dot(normed, wqkv_ref[...],
                  preferred_element_type=jnp.float32)          # (R, 3H) f32
    q = qkv[:, :H]                 # already scaled by head_dim**-0.5
    k = qkv[:, H:2 * H]            # already expanded over all query heads
    v = qkv[:, 2 * H:]

    # ---- per-head layout for RoPE + attention ----
    qh = q.reshape(R, n_heads, head_dim).transpose(1, 0, 2)    # (NH, R, D)
    kh = k.reshape(R, n_heads, head_dim).transpose(1, 0, 2)
    vh = v.reshape(R, n_heads, head_dim).transpose(1, 0, 2)

    # ---- RoPE (f32) ----
    half = head_dim // 2
    cos = cos_ref[...]                                         # (R, D)
    sin = sin_ref[...]
    def rope(t):                                               # t: (NH, R, D)
        t1 = t[..., :half]
        t2 = t[..., half:]
        rot = jnp.concatenate([-t2, t1], axis=-1)
        return t * cos + rot * sin
    qh = rope(qh)
    kh = rope(kh)

    # ---- attention over all (batch, head) pairs; batches isolated by the
    # block-diagonal additive mask ----
    dn_qk = (((2,), (2,)), ((0,), (0,)))
    scores = jax.lax.dot_general(qh, kh, dn_qk,
                                 preferred_element_type=jnp.float32)
    scores = scores + mask_ref[...][None, :, :]                # (NH, R, R)
    m = jnp.max(scores, axis=-1, keepdims=True)
    p = jnp.exp(scores - m)
    w = p / jnp.sum(p, axis=-1, keepdims=True)                 # exact divide
    dn_av = (((2,), (1,)), ((0,), (0,)))
    ctx = jax.lax.dot_general(w, vh, dn_av,
                              preferred_element_type=jnp.float32)  # (NH, R, D)
    attn = ctx.transpose(1, 0, 2).reshape(R, H)                # (R, H)

    # ---- out-projection + residual ----
    h1 = x + jnp.dot(attn.astype(WEIGHT_DTYPE), wo_ref[...],
                     preferred_element_type=jnp.float32)

    # ---- RMSNorm #2 (gamma folded into wgu) + SwiGLU MLP + residual ----
    var2 = jnp.mean(h1 * h1, axis=-1, keepdims=True)
    normed2 = (h1 * jax.lax.rsqrt(var2 + eps)).astype(WEIGHT_DTYPE)
    gu = jnp.dot(normed2, wgu_ref[...],
                 preferred_element_type=jnp.float32)           # (R, 2I) f32
    inter = gu.shape[-1] // 2
    g = gu[:, :inter]
    u = gu[:, inter:]
    act = ((g * jax.nn.sigmoid(g)) * u).astype(WEIGHT_DTYPE)
    out = h1 + jnp.dot(act, wd_ref[...], preferred_element_type=jnp.float32)

    o_ref[...] = out.astype(o_ref.dtype)


def llama_decoder_layer(fused, hidden_states):
    B, S, H = hidden_states.shape
    R = B * S
    x2d = hidden_states.reshape(R, H)
    kernel = functools.partial(_decoder_layer_kernel, eps=RMS_EPS,
                               n_heads=N_HEADS, head_dim=HEAD_DIM)
    vmem = lambda: pl.BlockSpec(memory_space=pltpu.MemorySpace.VMEM)
    out = pl.pallas_call(
        kernel,
        out_shape=jax.ShapeDtypeStruct((R, H), hidden_states.dtype),
        in_specs=[vmem() for _ in range(8)],
        out_specs=vmem(),
    )(x2d, fused["w_qkv_t"], fused["cos_bs"], fused["sin_bs"],
      fused["mask_full"], fused["wo_t"], fused["w_gu_t"], fused["wd_t"])
    return out.reshape(B, S, H)


# -------------------- one-time parameter / table preparation -----------------
def build_fused_params(params, cos, sin, mask):
    """Pre-transpose, fuse and bf16-cast weights (done once, off hot path)."""
    H, D, NH, NKV = HIDDEN, HEAD_DIM, N_HEADS, N_KV_HEADS
    B, S = BATCH, SEQ
    ln1 = params["input_ln_w"].astype(jnp.float32)
    ln2 = params["post_ln_w"].astype(jnp.float32)

    # Fold repeat_kv (repeat_interleave over kv heads) into the K/V weights.
    wk_rep = jnp.repeat(params["wk"].reshape(NKV, D, H), N_REP, axis=0).reshape(NH * D, H)
    wv_rep = jnp.repeat(params["wv"].reshape(NKV, D, H), N_REP, axis=0).reshape(NH * D, H)
    # Fold the attention scaling (head_dim**-0.5) into Wq (RoPE is linear).
    wq_scaled = params["wq"] * SCALING
    w_qkv = jnp.concatenate([wq_scaled, wk_rep, wv_rep], axis=0)   # (3H, H)
    # Fold RMSNorm gammas into the contracted-axis of the following matmuls:
    # (x*gamma) @ W.T == x @ (W * gamma[None, :]).T
    w_qkv_t = (w_qkv * ln1[None, :]).T                             # (H, 3H)
    w_gu = jnp.concatenate([params["wg"], params["wu"]], axis=0)   # (2I, H)
    w_gu_t = (w_gu * ln2[None, :]).T                               # (H, 2I)

    # Block-diagonal causal additive mask over the folded batch rows.
    mask_np = np.asarray(mask, np.float32)
    full = np.full((B * S, B * S), -1e9, np.float32)
    for b in range(B):
        full[b * S:(b + 1) * S, b * S:(b + 1) * S] = mask_np

    return {
        "w_qkv_t": w_qkv_t.astype(WEIGHT_DTYPE),
        "wo_t": params["wo"].T.astype(WEIGHT_DTYPE),
        "w_gu_t": w_gu_t.astype(WEIGHT_DTYPE),
        "wd_t": params["wd"].T.astype(WEIGHT_DTYPE),
        "cos_bs": jnp.tile(cos, (B, 1)).astype(jnp.float32),   # (B*S, D)
        "sin_bs": jnp.tile(sin, (B, 1)).astype(jnp.float32),
        "mask_full": jnp.asarray(full, jnp.float32),           # (B*S, B*S)
    }


# --------------------------- pure-JAX reference ------------------------------
def _ref_rmsnorm(x, w, eps=RMS_EPS):
    var = jnp.mean(x.astype(jnp.float32) ** 2, axis=-1, keepdims=True)
    return w * (x * jax.lax.rsqrt(var + eps))


def _ref_rotate_half(x):
    h = x.shape[-1] // 2
    return jnp.concatenate([-x[..., h:], x[..., :h]], axis=-1)


def _ref_layer(params, x, cos, sin, mask):
    B, S, H = x.shape
    residual = x
    hs = _ref_rmsnorm(x, params["input_ln_w"])
    q = (hs @ params["wq"].T).reshape(B, S, N_HEADS, HEAD_DIM).transpose(0, 2, 1, 3)
    k = (hs @ params["wk"].T).reshape(B, S, N_KV_HEADS, HEAD_DIM).transpose(0, 2, 1, 3)
    v = (hs @ params["wv"].T).reshape(B, S, N_KV_HEADS, HEAD_DIM).transpose(0, 2, 1, 3)
    c = cos[None, None]
    s = sin[None, None]
    q = q * c + _ref_rotate_half(q) * s
    k = k * c + _ref_rotate_half(k) * s
    k = jnp.repeat(k, N_REP, axis=1)
    v = jnp.repeat(v, N_REP, axis=1)
    scores = jnp.einsum("bhqd,bhkd->bhqk", q, k) * SCALING + mask[None, None]
    w = jax.nn.softmax(scores, axis=-1)
    attn = jnp.einsum("bhqk,bhkd->bhqd", w, v)
    attn = attn.transpose(0, 2, 1, 3).reshape(B, S, N_HEADS * HEAD_DIM)
    hs = residual + attn @ params["wo"].T
    residual = hs
    hs2 = _ref_rmsnorm(hs, params["post_ln_w"])
    g = hs2 @ params["wg"].T
    u = hs2 @ params["wu"].T
    return residual + ((g * jax.nn.sigmoid(g)) * u) @ params["wd"].T


# ------------------------------------ main -----------------------------------
def _init_params(key):
    ks = jax.random.split(key, 9)
    scale = 0.02
    return {
        # non-trivial gammas so the gamma-folding into weights is exercised
        "input_ln_w": 1.0 + 0.1 * jax.random.normal(ks[7], (HIDDEN,), DTYPE),
        "post_ln_w": 1.0 + 0.1 * jax.random.normal(ks[8], (HIDDEN,), DTYPE),
        "wq": scale * jax.random.normal(ks[0], (N_HEADS * HEAD_DIM, HIDDEN), DTYPE),
        "wk": scale * jax.random.normal(ks[1], (N_KV_HEADS * HEAD_DIM, HIDDEN), DTYPE),
        "wv": scale * jax.random.normal(ks[2], (N_KV_HEADS * HEAD_DIM, HIDDEN), DTYPE),
        "wo": scale * jax.random.normal(ks[3], (HIDDEN, N_HEADS * HEAD_DIM), DTYPE),
        "wg": scale * jax.random.normal(ks[4], (INTERMEDIATE, HIDDEN), DTYPE),
        "wu": scale * jax.random.normal(ks[5], (INTERMEDIATE, HIDDEN), DTYPE),
        "wd": scale * jax.random.normal(ks[6], (HIDDEN, INTERMEDIATE), DTYPE),
    }


def _rotary_tables(seq, dim, base=ROPE_BASE):
    inv_freq = 1.0 / (base ** (jnp.arange(0, dim, 2, dtype=jnp.float32) / dim))
    pos = jnp.arange(seq, dtype=jnp.float32)
    freqs = pos[:, None] * inv_freq[None, :]          # (S, dim/2)
    emb = jnp.concatenate([freqs, freqs], axis=-1)    # (S, dim)
    return jnp.cos(emb).astype(DTYPE), jnp.sin(emb).astype(DTYPE)


if __name__ == "__main__":
    key = jax.random.PRNGKey(0)
    k_params, k_x = jax.random.split(key)
    params = _init_params(k_params)
    x = jax.random.normal(k_x, (BATCH, SEQ, HIDDEN), DTYPE)
    cos, sin = _rotary_tables(SEQ, HEAD_DIM)
    # additive causal mask (0 on/below diagonal, large negative above)
    causal = jnp.tril(jnp.ones((SEQ, SEQ), dtype=bool))
    mask = jnp.where(causal, 0.0, -1e9).astype(DTYPE)

    fused = build_fused_params(params, cos, sin, mask)   # one-time prep

    out = jax.block_until_ready(llama_decoder_layer(fused, x))
    ref = jax.block_until_ready(_ref_layer(params, x, cos, sin, mask))
    # tolerance accounts for bf16 weights / MXU operands (f32 accumulation,
    # f32 softmax and f32 elementwise are kept); observed error << 1e-2.
    np.testing.assert_allclose(np.asarray(out), np.asarray(ref),
                               rtol=1e-2, atol=1e-2)
    print("KERNEL_OK")
</pallas_src>

<mosaic_0001>
module attributes {stable_mosaic.version = 11 : i64} {
  func.func @_decoder_layer_kernel(%arg0: memref<16x128xf32, #tpu.memory_space<vmem>>, %arg1: memref<128x384xbf16, #tpu.memory_space<vmem>>, %arg2: memref<16x32xf32, #tpu.memory_space<vmem>>, %arg3: memref<16x32xf32, #tpu.memory_space<vmem>>, %arg4: memref<16x16xf32, #tpu.memory_space<vmem>>, %arg5: memref<128x128xbf16, #tpu.memory_space<vmem>>, %arg6: memref<128x512xbf16, #tpu.memory_space<vmem>>, %arg7: memref<256x128xbf16, #tpu.memory_space<vmem>>, %arg8: memref<16x128xf32, #tpu.memory_space<vmem>>) attributes {dimension_semantics = [], scalar_prefetch = 0 : i64, scratch_operands = 0 : i64, tpu.core_type = #tpu.core_type<tc>} {
    %c0 = arith.constant 0 : index
    %c0_0 = arith.constant 0 : index
    %0 = vector.load %arg0[%c0, %c0_0] : memref<16x128xf32, #tpu.memory_space<vmem>>, vector<16x128xf32>
    %1 = arith.mulf %0, %0 : vector<16x128xf32>
    %cst = arith.constant dense<0.000000e+00> : vector<16xf32>
    %2 = vector.multi_reduction <add>, %1, %cst [1] : vector<16x128xf32> to vector<16xf32>
    %3 = vector.shape_cast %2 : vector<16xf32> to vector<16x1xf32>
    %cst_1 = arith.constant 1.280000e+02 : f32
    %4 = vector.broadcast %cst_1 : f32 to vector<16x1xf32>
    %5 = arith.divf %3, %4 : vector<16x1xf32>
    %cst_2 = arith.constant 9.99999997E-7 : f32
    %6 = vector.broadcast %cst_2 : f32 to vector<16x1xf32>
    %7 = arith.addf %5, %6 : vector<16x1xf32>
    %8 = math.rsqrt %7 : vector<16x1xf32>
    %9 = vector.broadcast %8 : vector<16x1xf32> to vector<16x128xf32>
    %10 = arith.mulf %0, %9 : vector<16x128xf32>
    %11 = arith.truncf %10 : vector<16x128xf32> to vector<16x128xbf16>
    %c0_3 = arith.constant 0 : index
    %c0_4 = arith.constant 0 : index
    %12 = vector.load %arg1[%c0_3, %c0_4] : memref<128x384xbf16, #tpu.memory_space<vmem>>, vector<128x384xbf16>
    %cst_5 = arith.constant dense<0.000000e+00> : vector<16x384xf32>
    %13 = tpu.matmul %11, %12, %cst_5 {dimension_numbers = #tpu.dot_dimension_numbers<[1], [0], [0], [1], [0, 0, 1, 1], [], []>} : vector<16x128xbf16>, vector<128x384xbf16>, vector<16x384xf32> -> vector<16x384xf32>
    %14 = vector.extract_strided_slice %13 {offsets = [0, 0], sizes = [16, 128], strides = [1, 1]} : vector<16x384xf32> to vector<16x128xf32>
    %15 = vector.extract_strided_slice %13 {offsets = [0, 128], sizes = [16, 128], strides = [1, 1]} : vector<16x384xf32> to vector<16x128xf32>
    %16 = vector.extract_strided_slice %13 {offsets = [0, 256], sizes = [16, 128], strides = [1, 1]} : vector<16x384xf32> to vector<16x128xf32>
    %17 = vector.shape_cast %14 : vector<16x128xf32> to vector<16x4x32xf32>
    %18 = tpu.transpose %17, [1, 0, 2] : vector<16x4x32xf32> -> vector<4x16x32xf32>
    %19 = vector.shape_cast %15 : vector<16x128xf32> to vector<16x4x32xf32>
    %20 = tpu.transpose %19, [1, 0, 2] : vector<16x4x32xf32> -> vector<4x16x32xf32>
    %21 = vector.shape_cast %16 : vector<16x128xf32> to vector<16x4x32xf32>
    %22 = tpu.transpose %21, [1, 0, 2] : vector<16x4x32xf32> -> vector<4x16x32xf32>
    %c0_6 = arith.constant 0 : index
    %c0_7 = arith.constant 0 : index
    %23 = vector.load %arg2[%c0_6, %c0_7] : memref<16x32xf32, #tpu.memory_space<vmem>>, vector<16x32xf32>
    %c0_8 = arith.constant 0 : index
    %c0_9 = arith.constant 0 : index
    %24 = vector.load %arg3[%c0_8, %c0_9] : memref<16x32xf32, #tpu.memory_space<vmem>>, vector<16x32xf32>
    %25 = vector.extract_strided_slice %18 {offsets = [0, 0, 0], sizes = [4, 16, 16], strides = [1, 1, 1]} : vector<4x16x32xf32> to vector<4x16x16xf32>
    %26 = vector.extract_strided_slice %18 {offsets = [0, 0, 16], sizes = [4, 16, 16], strides = [1, 1, 1]} : vector<4x16x32xf32> to vector<4x16x16xf32>
    %cst_10 = arith.constant 0.000000e+00 : f32
    %27 = vector.broadcast %cst_10 : f32 to vector<4x16x16xf32>
    %28 = arith.subf %27, %26 : vector<4x16x16xf32>
    %29 = tpu.concatenate %28, %25 in 2 : vector<4x16x16xf32>, vector<4x16x16xf32> -> vector<4x16x32xf32>
    %30 = vector.shape_cast %23 : vector<16x32xf32> to vector<1x16x32xf32>
    %31 = vector.broadcast %30 : vector<1x16x32xf32> to vector<4x16x32xf32>
    %32 = arith.mulf %18, %31 : vector<4x16x32xf32>
    %33 = vector.shape_cast %24 : vector<16x32xf32> to vector<1x16x32xf32>
    %34 = vector.broadcast %33 : vector<1x16x32xf32> to vector<4x16x32xf32>
    %35 = arith.mulf %29, %34 : vector<4x16x32xf32>
    %36 = arith.addf %32, %35 : vector<4x16x32xf32>
    %37 = vector.extract_strided_slice %20 {offsets = [0, 0, 0], sizes = [4, 16, 16], strides = [1, 1, 1]} : vector<4x16x32xf32> to vector<4x16x16xf32>
    %38 = vector.extract_strided_slice %20 {offsets = [0, 0, 16], sizes = [4, 16, 16], strides = [1, 1, 1]} : vector<4x16x32xf32> to vector<4x16x16xf32>
    %cst_11 = arith.constant 0.000000e+00 : f32
    %39 = vector.broadcast %cst_11 : f32 to vector<4x16x16xf32>
    %40 = arith.subf %39, %38 : vector<4x16x16xf32>
    %41 = tpu.concatenate %40, %37 in 2 : vector<4x16x16xf32>, vector<4x16x16xf32> -> vector<4x16x32xf32>
    %42 = vector.shape_cast %23 : vector<16x32xf32> to vector<1x16x32xf32>
    %43 = vector.broadcast %42 : vector<1x16x32xf32> to vector<4x16x32xf32>
    %44 = arith.mulf %20, %43 : vector<4x16x32xf32>
    %45 = vector.shape_cast %24 : vector<16x32xf32> to vector<1x16x32xf32>
    %46 = vector.broadcast %45 : vector<1x16x32xf32> to vector<4x16x32xf32>
    %47 = arith.mulf %41, %46 : vector<4x16x32xf32>
    %48 = arith.addf %44, %47 : vector<4x16x32xf32>
    %cst_12 = arith.constant dense<0.000000e+00> : vector<4x16x16xf32>
    %49 = tpu.matmul %36, %48, %cst_12 {dimension_numbers = #tpu.dot_dimension_numbers<[2], [2], [1], [1], [0, 0, 0, 1, 1, 1], [0], [0]>} : vector<4x16x32xf32>, vector<4x16x32xf32>, vector<4x16x16xf32> -> vector<4x16x16xf32>
    %c0_13 = arith.constant 0 : index
    %c0_14 = arith.constant 0 : index
    %50 = vector.load %arg4[%c0_13, %c0_14] : memref<16x16xf32, #tpu.memory_space<vmem>>, vector<16x16xf32>
    %51 = vector.shape_cast %50 : vector<16x16xf32> to vector<1x16x16xf32>
    %52 = vector.broadcast %51 : vector<1x16x16xf32> to vector<4x16x16xf32>
    %53 = arith.addf %49, %52 : vector<4x16x16xf32>
    %cst_15 = arith.constant dense<0xFF800000> : vector<4x16xf32>
    %54 = vector.multi_reduction <maximumf>, %53, %cst_15 [2] : vector<4x16x16xf32> to vector<4x16xf32>
    %55 = vector.shape_cast %54 : vector<4x16xf32> to vector<4x16x1xf32>
    %56 = vector.broadcast %55 : vector<4x16x1xf32> to vector<4x16x16xf32>
    %57 = arith.subf %53, %56 : vector<4x16x16xf32>
    %58 = math.exp %57 : vector<4x16x16xf32>
    %cst_16 = arith.constant dense<0.000000e+00> : vector<4x16xf32>
    %59 = vector.multi_reduction <add>, %58, %cst_16 [2] : vector<4x16x16xf32> to vector<4x16xf32>
    %60 = vector.shape_cast %59 : vector<4x16xf32> to vector<4x16x1xf32>
    %61 = vector.broadcast %60 : vector<4x16x1xf32> to vector<4x16x16xf32>
    %62 = arith.divf %58, %61 : vector<4x16x16xf32>
    %cst_17 = arith.constant dense<0.000000e+00> : vector<4x16x32xf32>
    %63 = tpu.matmul %62, %22, %cst_17 {dimension_numbers = #tpu.dot_dimension_numbers<[2], [1], [1], [2], [0, 0, 0, 1, 1, 2], [0], [0]>} : vector<4x16x16xf32>, vector<4x16x32xf32>, vector<4x16x32xf32> -> vector<4x16x32xf32>
    %64 = tpu.transpose %63, [1, 0, 2] : vector<4x16x32xf32> -> vector<16x4x32xf32>
    %65 = vector.shape_cast %64 : vector<16x4x32xf32> to vector<16x128xf32>
    %66 = arith.truncf %65 : vector<16x128xf32> to vector<16x128xbf16>
    %c0_18 = arith.constant 0 : index
    %c0_19 = arith.constant 0 : index
    %67 = vector.load %arg5[%c0_18, %c0_19] : memref<128x128xbf16, #tpu.memory_space<vmem>>, vector<128x128xbf16>
    %cst_20 = arith.constant dense<0.000000e+00> : vector<16x128xf32>
    %68 = tpu.matmul %66, %67, %cst_20 {dimension_numbers = #tpu.dot_dimension_numbers<[1], [0], [0], [1], [0, 0, 1, 1], [], []>} : vector<16x128xbf16>, vector<128x128xbf16>, vector<16x128xf32> -> vector<16x128xf32>
    %69 = arith.addf %0, %68 : vector<16x128xf32>
    %70 = arith.mulf %69, %69 : vector<16x128xf32>
    %cst_21 = arith.constant dense<0.000000e+00> : vector<16xf32>
    %71 = vector.multi_reduction <add>, %70, %cst_21 [1] : vector<16x128xf32> to vector<16xf32>
    %72 = vector.shape_cast %71 : vector<16xf32> to vector<16x1xf32>
    %cst_22 = arith.constant 1.280000e+02 : f32
    %73 = vector.broadcast %cst_22 : f32 to vector<16x1xf32>
    %74 = arith.divf %72, %73 : vector<16x1xf32>
    %cst_23 = arith.constant 9.99999997E-7 : f32
    %75 = vector.broadcast %cst_23 : f32 to vector<16x1xf32>
    %76 = arith.addf %74, %75 : vector<16x1xf32>
    %77 = math.rsqrt %76 : vector<16x1xf32>
    %78 = vector.broadcast %77 : vector<16x1xf32> to vector<16x128xf32>
    %79 = arith.mulf %69, %78 : vector<16x128xf32>
    %80 = arith.truncf %79 : vector<16x128xf32> to vector<16x128xbf16>
    %c0_24 = arith.constant 0 : index
    %c0_25 = arith.constant 0 : index
    %81 = vector.load %arg6[%c0_24, %c0_25] : memref<128x512xbf16, #tpu.memory_space<vmem>>, vector<128x512xbf16>
    %cst_26 = arith.constant dense<0.000000e+00> : vector<16x512xf32>
    %82 = tpu.matmul %80, %81, %cst_26 {dimension_numbers = #tpu.dot_dimension_numbers<[1], [0], [0], [1], [0, 0, 1, 1], [], []>} : vector<16x128xbf16>, vector<128x512xbf16>, vector<16x512xf32> -> vector<16x512xf32>
    %83 = vector.extract_strided_slice %82 {offsets = [0, 0], sizes = [16, 256], strides = [1, 1]} : vector<16x512xf32> to vector<16x256xf32>
    %84 = vector.extract_strided_slice %82 {offsets = [0, 256], sizes = [16, 256], strides = [1, 1]} : vector<16x512xf32> to vector<16x256xf32>
    %85 = arith.negf %83 : vector<16x256xf32>
    %86 = math.exp %85 : vector<16x256xf32>
    %cst_27 = arith.constant 1.000000e+00 : f32
    %87 = vector.broadcast %cst_27 : f32 to vector<16x256xf32>
    %88 = arith.addf %87, %86 : vector<16x256xf32>
    %89 = arith.divf %87, %88 : vector<16x256xf32>
    %90 = arith.mulf %83, %89 : vector<16x256xf32>
    %91 = arith.mulf %90, %84 : vector<16x256xf32>
    %92 = arith.truncf %91 : vector<16x256xf32> to vector<16x256xbf16>
    %c0_28 = arith.constant 0 : index
    %c0_29 = arith.constant 0 : index
    %93 = vector.load %arg7[%c0_28, %c0_29] : memref<256x128xbf16, #tpu.memory_space<vmem>>, vector<256x128xbf16>
    %cst_30 = arith.constant dense<0.000000e+00> : vector<16x128xf32>
    %94 = tpu.matmul %92, %93, %cst_30 {dimension_numbers = #tpu.dot_dimension_numbers<[1], [0], [0], [1], [0, 0, 1, 1], [], []>} : vector<16x256xbf16>, vector<256x128xbf16>, vector<16x128xf32> -> vector<16x128xf32>
    %95 = arith.addf %69, %94 : vector<16x128xf32>
    %c0_31 = arith.constant 0 : index
    %c0_32 = arith.constant 0 : index
    %96 = vector.load %arg8[%c0_31, %c0_32] : memref<16x128xf32, #tpu.memory_space<vmem>>, vector<16x128xf32>
    tpu.vector_store %arg8[%c0_31, %c0_32], %95 {strides = array<i32>} : memref<16x128xf32, #tpu.memory_space<vmem>>, vector<16x128xf32>,
    return
  }
}

</mosaic_0001>

<llo_original>
// kernel: tpu_custom_call.1
$region0: #{tpu_custom_call.1}
  #allocation0 [shape = 'u32[]', space=smem, size = 0x4, offset = 0x4, fixed_abs, tag = 'smem constant byte address 0x4 - core index']
  #allocation1 [shape = 'u32[144,128]{1,0:T(1,128)}', space=vmem, size = 0x12000, scoped, tag = 'internal scratch']
  %s0 = inlined_call_operand.hbm [shape: f32[16,128], index: 0, kind: input, shape index: {}]
  %s1 = inlined_call_operand.hbm [shape: bf16[128,384], index: 1, kind: input, shape index: {}]
  %s2 = inlined_call_operand.hbm [shape: f32[16,32], index: 2, kind: input, shape index: {}]
  %s3 = inlined_call_operand.hbm [shape: f32[16,32], index: 3, kind: input, shape index: {}]
  %s4 = inlined_call_operand.hbm [shape: f32[16,16], index: 4, kind: input, shape index: {}]
  %s5 = inlined_call_operand.hbm [shape: bf16[128,128], index: 5, kind: input, shape index: {}]
  %s6 = inlined_call_operand.hbm [shape: bf16[128,512], index: 6, kind: input, shape index: {}]
  %s7 = inlined_call_operand.hbm [shape: bf16[256,128], index: 7, kind: input, shape index: {}]
  %s8 = inlined_call_operand.hbm [shape: f32[16,128], index: 8, kind: output, shape index: {}]
  %s9 = sld [smem:[#allocation0]]
  $region74: #{tpu_custom_call.1} parent=0
    _
  %s11 = ssub.s32 1, %s9
  %s12 = scalar_select 0, %s11, %s9
  $region1: #{tpu_custom_call.1} parent=0
    #allocation2 [shape = 'u8[8192]{0}', space=vmem, size = 0x2000, scoped, tag = 'input window, operand 0, single buffered']
    #allocation3 [shape = 's32[1]{0}', space=sflag, size = 0x4, scoped, tag = 'scoped memory for tpu_custom_call.1']
    #allocation4 [shape = 's32[1]{0}', space=sflag, size = 0x4, scoped, tag = 'scoped memory for tpu_custom_call.1']
    #allocation5 [shape = 'u8[98304]{0}', space=vmem, size = 0x18000, scoped, tag = 'input window, operand 1, single buffered']
    #allocation6 [shape = 's32[1]{0}', space=sflag, size = 0x4, scoped, tag = 'scoped memory for tpu_custom_call.1']
    #allocation7 [shape = 'u8[8192]{0}', space=vmem, size = 0x2000, scoped, tag = 'input window, operand 2, single buffered']
    #allocation8 [shape = 'u8[8192]{0}', space=vmem, size = 0x2000, scoped, tag = 'input window, operand 3, single buffered']
    #allocation9 [shape = 's32[1]{0}', space=sflag, size = 0x4, scoped, tag = 'scoped memory for tpu_custom_call.1']
    #allocation10 [shape = 'u8[8192]{0}', space=vmem, size = 0x2000, scoped, tag = 'input window, operand 4, single buffered']
    #allocation11 [shape = 'u8[32768]{0}', space=vmem, size = 0x8000, scoped, tag = 'input window, operand 5, single buffered']
    #allocation12 [shape = 's32[1]{0}', space=sflag, size = 0x4, scoped, tag = 'scoped memory for tpu_custom_call.1']
    #allocation13 [shape = 'u8[131072]{0}', space=vmem, size = 0x20000, scoped, tag = 'input window, operand 6, single buffered']
    #allocation14 [shape = 'u8[65536]{0}', space=vmem, size = 0x10000, scoped, tag = 'input window, operand 7, single buffered']
    #allocation15 [shape = 's32[1]{0}', space=sflag, size = 0x4, scoped, tag = 'scoped memory for tpu_custom_call.1']
    #allocation16 [shape = 'u8[8192]{0}', space=vmem, size = 0x2000, scoped, tag = 'output window, operand 0, single buffered']
    %13 = vsyncpa [#allocation3], 0
    %14 = vsyncpa [#allocation6], 0
    %15 = vsyncpa [#allocation9], 0
    %16 = vsyncpa [#allocation12], 0
    %17 = vsyncpa [#allocation15], 0
    %18 = vsyncpa [#allocation4], 0
    // Predicated region
    $region2: #{tpu_custom_call.1} parent=1 // pred_check
      _
    $region3: #{tpu_custom_call.1} parent=1 // pred_check_branch
      %20 = sbr.rel (0) target = $region5
    $region4: #{tpu_custom_call.1} parent=1 // pred_region
      %s22 = ssub.s32 256, 256
      %23 = vsyncadd [#allocation3], %s22
      %s24 = sshll.u32 [#allocation2], 4
      %s25 = int_to_ptr.vmem [resolvable:$true] %s24
      %30 = dma.hbm_to_vmem [thread:$0]  %s0, 256, %s25, [#allocation3], 128, 128, 8
    $region5: #{tpu_custom_call.1} parent=1 // pred_fallthru
      _
    // Predicated region
    $region6: #{tpu_custom_call.1} parent=1 // pred_check
      _
    $region7: #{tpu_custom_call.1} parent=1 // pred_check_branch
      %32 = sbr.rel (0) target = $region9
    $region8: #{tpu_custom_call.1} parent=1 // pred_region
      %s34 = ssub.s32 3072, 3072
      %35 = vsyncadd [#allocation6], %s34
      %s36 = sshll.u32 [#allocation5], 4
      %s37 = int_to_ptr.vmem [resolvable:$true] %s36
      %42 = dma.hbm_to_vmem [thread:$0]  %s1, 3072, %s37, [#allocation6], 192, 192, 12
    $region9: #{tpu_custom_call.1} parent=1 // pred_fallthru
      _
    // Predicated region
    $region10: #{tpu_custom_call.1} parent=1 // pred_check
      _
    $region11: #{tpu_custom_call.1} parent=1 // pred_check_branch
      %44 = sbr.rel (0) target = $region13
    $region12: #{tpu_custom_call.1} parent=1 // pred_region
      %s46 = ssub.s32 256, 256
      %47 = vsyncadd [#allocation6], %s46
      %s48 = sshll.u32 [#allocation7], 4
      %s49 = int_to_ptr.vmem [resolvable:$true] %s48
      %54 = dma.hbm_to_vmem [thread:$0]  %s2, 256, %s49, [#allocation6], 128, 128, 8
    $region13: #{tpu_custom_call.1} parent=1 // pred_fallthru
      _
    // Predicated region
    $region14: #{tpu_custom_call.1} parent=1 // pred_check
      _
    $region15: #{tpu_custom_call.1} parent=1 // pred_check_branch
      %56 = sbr.rel (0) target = $region17
    $region16: #{tpu_custom_call.1} parent=1 // pred_region
      %s58 = ssub.s32 256, 256
      %59 = vsyncadd [#allocation9], %s58
      %s60 = sshll.u32 [#allocation8], 4
      %s61 = int_to_ptr.vmem [resolvable:$true] %s60
      %66 = dma.hbm_to_vmem [thread:$0]  %s3, 256, %s61, [#allocation9], 128, 128, 8
    $region17: #{tpu_custom_call.1} parent=1 // pred_fallthru
      _
    // Predicated region
    $region18: #{tpu_custom_call.1} parent=1 // pred_check
      _
    $region19: #{tpu_custom_call.1} parent=1 // pred_check_branch
      %68 = sbr.rel (0) target = $region21
    $region20: #{tpu_custom_call.1} parent=1 // pred_region
      %s70 = ssub.s32 256, 256
      %71 = vsyncadd [#allocation9], %s70
      %s72 = sshll.u32 [#allocation10], 4
      %s73 = int_to_ptr.vmem [resolvable:$true] %s72
      %78 = dma.hbm_to_vmem [thread:$0]  %s4, 256, %s73, [#allocation9], 128, 128, 8
    $region21: #{tpu_custom_call.1} parent=1 // pred_fallthru
      _
    // Predicated region
    $region22: #{tpu_custom_call.1} parent=1 // pred_check
      _
    $region23: #{tpu_custom_call.1} parent=1 // pred_check_branch
      %80 = sbr.rel (0) target = $region25
    $region24: #{tpu_custom_call.1} parent=1 // pred_region
      %s82 = ssub.s32 1024, 1024
      %83 = vsyncadd [#allocation12], %s82
      %s84 = sshll.u32 [#allocation11], 4
      %s85 = int_to_ptr.vmem [resolvable:$true] %s84
      %90 = dma.hbm_to_vmem [thread:$0]  %s5, 1024, %s85, [#allocation12], 64, 64, 4
    $region25: #{tpu_custom_call.1} parent=1 // pred_fallthru
      _
    // Predicated region
    $region26: #{tpu_custom_call.1} parent=1 // pred_check
      _
    $region27: #{tpu_custom_call.1} parent=1 // pred_check_branch
      %92 = sbr.rel (0) target = $region29
    $region28: #{tpu_custom_call.1} parent=1 // pred_region
      %s94 = ssub.s32 4096, 4096
      %95 = vsyncadd [#allocation12], %s94
      %s96 = sshll.u32 [#allocation13], 4
      %s97 = int_to_ptr.vmem [resolvable:$true] %s96
      %102 = dma.hbm_to_vmem [thread:$0]  %s6, 4096, %s97, [#allocation12], 256, 256, 16
    $region29: #{tpu_custom_call.1} parent=1 // pred_fallthru
      _
    // Predicated region
    $region30: #{tpu_custom_call.1} parent=1 // pred_check
      _
    $region31: #{tpu_custom_call.1} parent=1 // pred_check_branch
      %104 = sbr.rel (0) target = $region33
    $region32: #{tpu_custom_call.1} parent=1 // pred_region
      %s106 = ssub.s32 2048, 2048
      %107 = vsyncadd [#allocation15], %s106
      %s108 = sshll.u32 [#allocation14], 4
      %s109 = int_to_ptr.vmem [resolvable:$true] %s108
      %114 = dma.hbm_to_vmem [thread:$0]  %s7, 2048, %s109, [#allocation15], 64, 64, 4
    $region33: #{tpu_custom_call.1} parent=1 // pred_fallthru
      _
    // Predicated region
    $region34: #{tpu_custom_call.1} parent=1 // pred_check
      _
    $region35: #{tpu_custom_call.1} parent=1 // pred_check_branch
      %116 = sbr.rel (0) target = $region37
    $region36: #{tpu_custom_call.1} parent=1 // pred_region
      %117 = dma.done [#allocation3], 256
    $region37: #{tpu_custom_call.1} parent=1 // pred_fallthru
      _
    // Predicated region
    $region38: #{tpu_custom_call.1} parent=1 // pred_check
      _
    $region39: #{tpu_custom_call.1} parent=1 // pred_check_branch
      %119 = sbr.rel (0) target = $region41
    $region40: #{tpu_custom_call.1} parent=1 // pred_region
      %120 = dma.done [#allocation6], 3072
    $region41: #{tpu_custom_call.1} parent=1 // pred_fallthru
      _
    // Predicated region
    $region42: #{tpu_custom_call.1} parent=1 // pred_check
      _
    $region43: #{tpu_custom_call.1} parent=1 // pred_check_branch
      %122 = sbr.rel (0) target = $region45
    $region44: #{tpu_custom_call.1} parent=1 // pred_region
      %123 = dma.done [#allocation6], 256
    $region45: #{tpu_custom_call.1} parent=1 // pred_fallthru
      _
    // Predicated region
    $region46: #{tpu_custom_call.1} parent=1 // pred_check
      _
    $region47: #{tpu_custom_call.1} parent=1 // pred_check_branch
      %125 = sbr.rel (0) target = $region49
    $region48: #{tpu_custom_call.1} parent=1 // pred_region
      %126 = dma.done [#allocation9], 256
    $region49: #{tpu_custom_call.1} parent=1 // pred_fallthru
      _
    // Predicated region
    $region50: #{tpu_custom_call.1} parent=1 // pred_check
      _
    $region51: #{tpu_custom_call.1} parent=1 // pred_check_branch
      %128 = sbr.rel (0) target = $region53
    $region52: #{tpu_custom_call.1} parent=1 // pred_region
      %129 = dma.done [#allocation9], 256
    $region53: #{tpu_custom_call.1} parent=1 // pred_fallthru
      _
    // Predicated region
    $region54: #{tpu_custom_call.1} parent=1 // pred_check
      _
    $region55: #{tpu_custom_call.1} parent=1 // pred_check_branch
      %131 = sbr.rel (0) target = $region57
    $region56: #{tpu_custom_call.1} parent=1 // pred_region
      %132 = dma.done [#allocation12], 1024
    $region57: #{tpu_custom_call.1} parent=1 // pred_fallthru
      _
    // Predicated region
    $region58: #{tpu_custom_call.1} parent=1 // pred_check
      _
    $region59: #{tpu_custom_call.1} parent=1 // pred_check_branch
      %134 = sbr.rel (0) target = $region61
    $region60: #{tpu_custom_call.1} parent=1 // pred_region
      %135 = dma.done [#allocation12], 4096
    $region61: #{tpu_custom_call.1} parent=1 // pred_fallthru
      _
    // Predicated region
    $region62: #{tpu_custom_call.1} parent=1 // pred_check
      _
    $region63: #{tpu_custom_call.1} parent=1 // pred_check_branch
      %137 = sbr.rel (0) target = $region65
    $region64: #{tpu_custom_call.1} parent=1 // pred_region
      %138 = dma.done [#allocation15], 2048
    $region65: #{tpu_custom_call.1} parent=1 // pred_fallthru
      _
    %v140 = vld [vmem:[#allocation2] sm:$0xff]
    %v141 = vld [vmem:[#allocation2 + $0x8] sm:$0xff]
    %v142 = vmul.f32 %v140, %v140
    %v143 = vmul.f32 %v141, %v141
    %144 = vadd.xlane.f32.xlu0 %v142
    %v145 = vpop.xlane.xlu0 %144
    %146 = vadd.xlane.f32.xlu0 %v143
    %v147 = vpop.xlane.xlu0 %146
    %v148 = vrcp.pop 128.0
    %v149 = vmul.f32 %v145, %v148
    %v150 = vmul.f32 %v147, %v148
    %v151 = vadd.f32 %v149, 1e-06
    %v152 = vadd.f32 %v150, 1e-06
    %v153 = vrsqrt.pop %v151
    %v154 = vrsqrt.pop %v152
    %v155 = vmul.f32 %v140, %v153
    %v156 = vmul.f32 %v141, %v154
    %v157 = vpack.c.bf16 %v156, %v155
    %v158 = vld [vmem:[#allocation5] sm:$0xff]
    %v159 = vld [vmem:[#allocation5 + $0x8] sm:$0xf]
    %v160 = vld [vmem:[#allocation5 + $0xc] sm:$0xff]
    %v161 = vld [vmem:[#allocation5 + $0x14] sm:$0xf]
    %v162 = vld [vmem:[#allocation5 + $0x18] sm:$0xff]
    %v163 = vld [vmem:[#allocation5 + $0x20] sm:$0xf]
    %v164 = vld [vmem:[#allocation5 + $0x24] sm:$0xff]
    %v165 = vld [vmem:[#allocation5 + $0x2c] sm:$0xf]
    %v166 = vld [vmem:[#allocation5 + $0x30] sm:$0xff]
    %v167 = vld [vmem:[#allocation5 + $0x38] sm:$0xf]
    %v168 = vld [vmem:[#allocation5 + $0x3c] sm:$0xff]
    %v169 = vld [vmem:[#allocation5 + $0x44] sm:$0xf]
    %v170 = vld [vmem:[#allocation5 + $0x48] sm:$0xff]
    %v171 = vld [vmem:[#allocation5 + $0x50] sm:$0xf]
    %v172 = vld [vmem:[#allocation5 + $0x54] sm:$0xff]
    %v173 = vld [vmem:[#allocation5 + $0x5c] sm:$0xf]
    %v174 = vld [vmem:[#allocation5 + $0x60] sm:$0xff]
    %v175 = vld [vmem:[#allocation5 + $0x68] sm:$0xf]
    %v176 = vld [vmem:[#allocation5 + $0x6c] sm:$0xff]
    %v177 = vld [vmem:[#allocation5 + $0x74] sm:$0xf]
    %v178 = vld [vmem:[#allocation5 + $0x78] sm:$0xff]
    %v179 = vld [vmem:[#allocation5 + $0x80] sm:$0xf]
    %v180 = vld [vmem:[#allocation5 + $0x84] sm:$0xff]
    %v181 = vld [vmem:[#allocation5 + $0x8c] sm:$0xf]
    %v182 = vld [vmem:[#allocation5 + $0x90] sm:$0xff]
    %v183 = vld [vmem:[#allocation5 + $0x98] sm:$0xf]
    %v184 = vld [vmem:[#allocation5 + $0x9c] sm:$0xff]
    %v185 = vld [vmem:[#allocation5 + $0xa4] sm:$0xf]
    %v186 = vld [vmem:[#allocation5 + $0xa8] sm:$0xff]
    %v187 = vld [vmem:[#allocation5 + $0xb0] sm:$0xf]
    %v188 = vld [vmem:[#allocation5 + $0xb4] sm:$0xff]
    %v189 = vld [vmem:[#allocation5 + $0xbc] sm:$0xf]
    %v222 = vunpack.c.l.b16 %v158
    %v223 = vunpack.c.h.b16 %v158
    %v224 = vunpack.c.l.b16 %v159
    %v225 = vunpack.c.l.b16 %v160
    %v226 = vunpack.c.h.b16 %v160
    %v227 = vunpack.c.l.b16 %v161
    %v228 = vunpack.c.l.b16 %v162
    %v229 = vunpack.c.h.b16 %v162
    %v230 = vunpack.c.l.b16 %v163
    %v231 = vunpack.c.l.b16 %v164
    %v232 = vunpack.c.h.b16 %v164
    %v233 = vunpack.c.l.b16 %v165
    %v234 = vunpack.c.l.b16 %v166
    %v235 = vunpack.c.h.b16 %v166
    %v236 = vunpack.c.l.b16 %v167
    %v237 = vunpack.c.l.b16 %v168
    %v238 = vunpack.c.h.b16 %v168
    %v239 = vunpack.c.l.b16 %v169
    %v240 = vunpack.c.l.b16 %v170
    %v241 = vunpack.c.h.b16 %v170
    %v242 = vunpack.c.l.b16 %v171
    %v243 = vunpack.c.l.b16 %v172
    %v244 = vunpack.c.h.b16 %v172
    %v245 = vunpack.c.l.b16 %v173
    %v246 = vunpack.c.l.b16 %v174
    %v247 = vunpack.c.h.b16 %v174
    %v248 = vunpack.c.l.b16 %v175
    %v249 = vunpack.c.l.b16 %v176
    %v250 = vunpack.c.h.b16 %v176
    %v251 = vunpack.c.l.b16 %v177
    %v252 = vunpack.c.l.b16 %v178
    %v253 = vunpack.c.h.b16 %v178
    %v254 = vunpack.c.l.b16 %v179
    %v255 = vunpack.c.l.b16 %v180
    %v256 = vunpack.c.h.b16 %v180
    %v257 = vunpack.c.l.b16 %v181
    %v258 = vunpack.c.l.b16 %v182
    %v259 = vunpack.c.h.b16 %v182
    %v260 = vunpack.c.l.b16 %v183
    %v261 = vunpack.c.l.b16 %v184
    %v262 = vunpack.c.h.b16 %v184
    %v263 = vunpack.c.l.b16 %v185
    %v264 = vunpack.c.l.b16 %v186
    %v265 = vunpack.c.h.b16 %v186
    %v266 = vunpack.c.l.b16 %v187
    %v267 = vunpack.c.l.b16 %v188
    %v268 = vunpack.c.h.b16 %v188
    %v269 = vunpack.c.l.b16 %v189
    %v270 = vpack.c.b16 %v225, %v222
    %v271 = vpack.c.b16 %v226, %v223
    %v272 = vpack.c.b16 %v227, %v224
    %v273 = vpack.c.b16 %v231, %v228
    %v274 = vpack.c.b16 %v232, %v229
    %v275 = vpack.c.b16 %v233, %v230
    %v276 = vpack.c.b16 %v237, %v234
    %v277 = vpack.c.b16 %v238, %v235
    %v278 = vpack.c.b16 %v239, %v236
    %v279 = vpack.c.b16 %v243, %v240
    %v280 = vpack.c.b16 %v244, %v241
    %v281 = vpack.c.b16 %v245, %v242
    %v282 = vpack.c.b16 %v249, %v246
    %v283 = vpack.c.b16 %v250, %v247
    %v284 = vpack.c.b16 %v251, %v248
    %v285 = vpack.c.b16 %v255, %v252
    %v286 = vpack.c.b16 %v256, %v253
    %v287 = vpack.c.b16 %v257, %v254
    %v288 = vpack.c.b16 %v261, %v258
    %v289 = vpack.c.b16 %v262, %v259
    %v290 = vpack.c.b16 %v263, %v260
    %v291 = vpack.c.b16 %v267, %v264
    %v292 = vpack.c.b16 %v268, %v265
    %v293 = vpack.c.b16 %v269, %v266
    %318 = vmatprep.subr.bf16.mxu0 %v271
    %319 = vmatpush1.bf16.msra.mxu0 %v270
    %320 = vmatprep.subr.bf16.mxu0 %v274
    %321 = vmatpush1.bf16.msra.mxu0 %v273
    %322 = vmatprep.subr.bf16.mxu0 %v277
    %323 = vmatpush1.bf16.msra.mxu0 %v276
    %324 = vmatprep.subr.bf16.mxu0 %v280
    %325 = vmatpush1.bf16.msra.mxu0 %v279
    %326 = vmatprep.subr.bf16.mxu0 %v283
    %327 = vmatpush1.bf16.msra.mxu0 %v282
    %328 = vmatprep.subr.bf16.mxu0 %v286
    %329 = vmatpush1.bf16.msra.mxu0 %v285
    %330 = vmatprep.subr.bf16.mxu0 %v289
    %331 = vmatpush1.bf16.msra.mxu0 %v288
    %332 = vmatprep.subr.bf16.mxu0 %v292
    %333 = vmatpush1.bf16.msra.mxu0 %v291
    %334 = vmatprep.subr.bf16.mxu0 0
    %335 = vmatpush1.bf16.msra.mxu0 0
    %336 = vmatprep.subr.bf16.mxu0 0
    %337 = vmatpush1.bf16.msra.mxu0 0
    %338 = vmatprep.subr.bf16.mxu0 0
    %339 = vmatpush1.bf16.msra.mxu0 0
    %340 = vmatprep.subr.bf16.mxu0 0
    %341 = vmatpush1.bf16.msra.mxu0 0
    %342 = vmatprep.subr.bf16.mxu0 0
    %343 = vmatpush1.bf16.msra.mxu0 0
    %344 = vmatprep.subr.bf16.mxu0 0
    %345 = vmatpush1.bf16.msra.mxu0 0
    %346 = vmatprep.subr.bf16.mxu0 0
    %347 = vmatpush1.bf16.msra.mxu0 0
    %348 = vmatprep.subr.bf16.mxu0 0
    %349 = vmatpush1.bf16.msra.mxu0 0
    %350 = vmatprep.mubr.bf16.mxu0 0
    %351 = vmatmul.mubr.bf16.gmra.mrb[0].mxu0 %v157
    %v352 = vpop.f32.mrb[0].mxu0
    %v353 = vadd.f32 0.0, %v352
    %v354 = vpop.f32.mrb[0].mxu0
    %v355 = vadd.f32 0.0, %v354
    %v356 = vpop.f32.mrb[0].mxu0
    %v357 = vadd.f32 0.0, %v356
    %v358 = vpop.f32.mrb[0].mxu0
    %v359 = vadd.f32 0.0, %v358
    %360 = vdwg.mxu0
    %361 = vmatprep.subr.bf16.mxu0 0
    %362 = vmatpush1.bf16.msra.mxu0 %v272
    %363 = vmatprep.subr.bf16.mxu0 0
    %364 = vmatpush1.bf16.msra.mxu0 %v275
    %365 = vmatprep.subr.bf16.mxu0 0
    %366 = vmatpush1.bf16.msra.mxu0 %v278
    %367 = vmatprep.subr.bf16.mxu0 0
    %368 = vmatpush1.bf16.msra.mxu0 %v281
    %369 = vmatprep.subr.bf16.mxu0 0
    %370 = vmatpush1.bf16.msra.mxu0 %v284
    %371 = vmatprep.subr.bf16.mxu0 0
    %372 = vmatpush1.bf16.msra.mxu0 %v287
    %373 = vmatprep.subr.bf16.mxu0 0
    %374 = vmatpush1.bf16.msra.mxu0 %v290
    %375 = vmatprep.subr.bf16.mxu0 0
    %376 = vmatpush1.bf16.msra.mxu0 %v293
    %377 = vmatprep.subr.bf16.mxu0 0
    %378 = vmatpush1.bf16.msra.mxu0 0
    %379 = vmatprep.subr.bf16.mxu0 0
    %380 = vmatpush1.bf16.msra.mxu0 0
    %381 = vmatprep.subr.bf16.mxu0 0
    %382 = vmatpush1.bf16.msra.mxu0 0
    %383 = vmatprep.subr.bf16.mxu0 0
    %384 = vmatpush1.bf16.msra.mxu0 0
    %385 = vmatprep.subr.bf16.mxu0 0
    %386 = vmatpush1.bf16.msra.mxu0 0
    %387 = vmatprep.subr.bf16.mxu0 0
    %388 = vmatpush1.bf16.msra.mxu0 0
    %389 = vmatprep.subr.bf16.mxu0 0
    %390 = vmatpush1.bf16.msra.mxu0 0
    %391 = vmatprep.subr.bf16.mxu0 0
    %392 = vmatpush1.bf16.msra.mxu0 0
    %393 = vmatprep.mubr.bf16.mxu0 0
    %394 = vmatmul.mubr.bf16.gmra.mrb[0].mxu0 %v157
    %v395 = vpop.f32.mrb[0].mxu0
    %v396 = vadd.f32 0.0, %v395
    %v397 = vpop.f32.mrb[0].mxu0
    %v398 = vpop.f32.mrb[0].mxu0
    %v399 = vadd.f32 0.0, %v398
    %v400 = vpop.f32.mrb[0].mxu0
    %401 = vdwg.mxu0
    %404 = vrot.lane.b32.xlu0 %v353, 96
    %v405 = vpop.permute.xlu0 %404
    %406 = vrot.lane.b32.xlu0 %v357, 96
    %v407 = vpop.permute.xlu0 %406
    %410 = vrot.lane.b32.xlu0 %v353, 64
    %v411 = vpop.permute.xlu0 %410
    %412 = vrot.lane.b32.xlu0 %v357, 64
    %v413 = vpop.permute.xlu0 %412
    %416 = vrot.lane.b32.xlu0 %v353, 32
    %v417 = vpop.permute.xlu0 %416
    %418 = vrot.lane.b32.xlu0 %v357, 32
    %v419 = vpop.permute.xlu0 %418
    %v422 = vcombine.low %v353, %v411
    %v423 = vcombine.high %v353, %v411
    %v425 = vunpack.c.l.s4 1983009808
    %v426 = vunpack.c.0.s8 %v425
    %v427 = vlaneseq
    %v428 = vshrl.u32 %v427, 7
    %v429 = vsub.s32 %v426, %v428
    %v430 = vrot.slane %v422, %v429
    %v432 = vunpack.c.l.s4 1983009808
    %v433 = vunpack.c.0.s8 %v432
    %v434 = vlaneseq
    %v435 = vshrl.u32 %v434, 7
    %v436 = vsub.s32 %v433, %v435
    %v437 = vrot.slane %v423, %v436
    %v438 = vcombine.low %v405, %v417
    %v439 = vcombine.high %v405, %v417
    %v441 = vunpack.c.l.s4 1983009808
    %v442 = vunpack.c.0.s8 %v441
    %v443 = vlaneseq
    %v444 = vshrl.u32 %v443, 7
    %v445 = vsub.s32 %v442, %v444
    %v446 = vrot.slane %v438, %v445
    %v448 = vunpack.c.l.s4 1983009808
    %v449 = vunpack.c.0.s8 %v448
    %v450 = vlaneseq
    %v451 = vshrl.u32 %v450, 7
    %v452 = vsub.s32 %v449, %v451
    %v453 = vrot.slane %v439, %v452
    %v454 = vcombine.low %v430, %v446
    %v455 = vcombine.high %v430, %v446
    %v457 = vunpack.c.l.s4 1934713408
    %v458 = vunpack.c.0.s8 %v457
    %v459 = vlaneseq
    %v460 = vshrl.u32 %v459, 7
    %v461 = vsub.s32 %v458, %v460
    %v462 = vrot.slane %v454, %v461
    %v464 = vunpack.c.l.s4 1934713408
    %v465 = vunpack.c.0.s8 %v464
    %v466 = vlaneseq
    %v467 = vshrl.u32 %v466, 7
    %v468 = vsub.s32 %v465, %v467
    %v469 = vrot.slane %v455, %v468
    %v470 = vcombine.low %v437, %v453
    %v471 = vcombine.high %v437, %v453
    %v473 = vunpack.c.l.s4 1934713408
    %v474 = vunpack.c.0.s8 %v473
    %v475 = vlaneseq
    %v476 = vshrl.u32 %v475, 7
    %v477 = vsub.s32 %v474, %v476
    %v478 = vrot.slane %v470, %v477
    %v480 = vunpack.c.l.s4 1934713408
    %v481 = vunpack.c.0.s8 %v480
    %v482 = vlaneseq
    %v483 = vshrl.u32 %v482, 7
    %v484 = vsub.s32 %v481, %v483
    %v485 = vrot.slane %v471, %v484
    %v486 = vcombine.high %v462, 0.0
    %v487 = vcombine.high %v469, 0.0
    %v488 = vcombine.high %v478, 0.0
    %v489 = vcombine.high %v485, 0.0
    %v490 = vcombine.low %v357, %v413
    %v491 = vcombine.high %v357, %v413
    %v493 = vunpack.c.l.s4 1983009808
    %v494 = vunpack.c.0.s8 %v493
    %v495 = vlaneseq
    %v496 = vshrl.u32 %v495, 7
    %v497 = vsub.s32 %v494, %v496
    %v498 = vrot.slane %v490, %v497
    %v500 = vunpack.c.l.s4 1983009808
    %v501 = vunpack.c.0.s8 %v500
    %v502 = vlaneseq
    %v503 = vshrl.u32 %v502, 7
    %v504 = vsub.s32 %v501, %v503
    %v505 = vrot.slane %v491, %v504
    %v506 = vcombine.low %v407, %v419
    %v507 = vcombine.high %v407, %v419
    %v509 = vunpack.c.l.s4 1983009808
    %v510 = vunpack.c.0.s8 %v509
    %v511 = vlaneseq
    %v512 = vshrl.u32 %v511, 7
    %v513 = vsub.s32 %v510, %v512
    %v514 = vrot.slane %v506, %v513
    %v516 = vunpack.c.l.s4 1983009808
    %v517 = vunpack.c.0.s8 %v516
    %v518 = vlaneseq
    %v519 = vshrl.u32 %v518, 7
    %v520 = vsub.s32 %v517, %v519
    %v521 = vrot.slane %v507, %v520
    %v522 = vcombine.low %v498, %v514
    %v523 = vcombine.high %v498, %v514
    %v525 = vunpack.c.l.s4 1934713408
    %v526 = vunpack.c.0.s8 %v525
    %v527 = vlaneseq
    %v528 = vshrl.u32 %v527, 7
    %v529 = vsub.s32 %v526, %v528
    %v530 = vrot.slane %v522, %v529
    %v532 = vunpack.c.l.s4 1934713408
    %v533 = vunpack.c.0.s8 %v532
    %v534 = vlaneseq
    %v535 = vshrl.u32 %v534, 7
    %v536 = vsub.s32 %v533, %v535
    %v537 = vrot.slane %v523, %v536
    %v538 = vcombine.low %v505, %v521
    %v539 = vcombine.high %v505, %v521
    %v541 = vunpack.c.l.s4 1934713408
    %v542 = vunpack.c.0.s8 %v541
    %v543 = vlaneseq
    %v544 = vshrl.u32 %v543, 7
    %v545 = vsub.s32 %v542, %v544
    %v546 = vrot.slane %v538, %v545
    %v548 = vunpack.c.l.s4 1934713408
    %v549 = vunpack.c.0.s8 %v548
    %v550 = vlaneseq
    %v551 = vshrl.u32 %v550, 7
    %v552 = vsub.s32 %v549, %v551
    %v553 = vrot.slane %v539, %v552
    %v554 = vcombine.high %v530, 0.0
    %v555 = vcombine.high %v537, 0.0
    %v556 = vcombine.high %v546, 0.0
    %v557 = vcombine.high %v553, 0.0
    %v558 = vcombine.low %v462, %v469
    %v560 = vunpack.c.l.s4 1983009808
    %v561 = vunpack.c.0.s8 %v560
    %v562 = vlaneseq
    %v563 = vshrl.u32 %v562, 7
    %v564 = vsub.s32 %v561, %v563
    %v565 = vrot.slane %v558, %v564
    %v566 = vcombine.low %v486, %v487
    %v568 = vunpack.c.l.s4 1983009808
    %v569 = vunpack.c.0.s8 %v568
    %v570 = vlaneseq
    %v571 = vshrl.u32 %v570, 7
    %v572 = vsub.s32 %v569, %v571
    %v573 = vrot.slane %v566, %v572
    %v574 = vcombine.low %v478, %v485
    %v576 = vunpack.c.l.s4 1983009808
    %v577 = vunpack.c.0.s8 %v576
    %v578 = vlaneseq
    %v579 = vshrl.u32 %v578, 7
    %v580 = vsub.s32 %v577, %v579
    %v581 = vrot.slane %v574, %v580
    %v582 = vcombine.low %v488, %v489
    %v584 = vunpack.c.l.s4 1983009808
    %v585 = vunpack.c.0.s8 %v584
    %v586 = vlaneseq
    %v587 = vshrl.u32 %v586, 7
    %v588 = vsub.s32 %v585, %v587
    %v589 = vrot.slane %v582, %v588
    %v590 = vcombine.low %v565, %v573
    %v591 = vcombine.high %v565, %v573
    %v593 = vunpack.c.l.s4 1934713408
    %v594 = vunpack.c.0.s8 %v593
    %v595 = vlaneseq
    %v596 = vshrl.u32 %v595, 7
    %v597 = vsub.s32 %v594, %v596
    %v598 = vrot.slane %v590, %v597
    %v600 = vunpack.c.l.s4 1934713408
    %v601 = vunpack.c.0.s8 %v600
    %v602 = vlaneseq
    %v603 = vshrl.u32 %v602, 7
    %v604 = vsub.s32 %v601, %v603
    %v605 = vrot.slane %v591, %v604
    %v606 = vcombine.low %v581, %v589
    %v607 = vcombine.high %v581, %v589
    %v609 = vunpack.c.l.s4 1934713408
    %v610 = vunpack.c.0.s8 %v609
    %v611 = vlaneseq
    %v612 = vshrl.u32 %v611, 7
    %v613 = vsub.s32 %v610, %v612
    %v614 = vrot.slane %v606, %v613
    %v616 = vunpack.c.l.s4 1934713408
    %v617 = vunpack.c.0.s8 %v616
    %v618 = vlaneseq
    %v619 = vshrl.u32 %v618, 7
    %v620 = vsub.s32 %v617, %v619
    %v621 = vrot.slane %v607, %v620
    %v622 = vcombine.low %v598, %v614
    %v623 = vcombine.high %v598, %v614
    %v624 = vcombine.low %v605, %v621
    %v625 = vcombine.high %v605, %v621
    %v626 = vcombine.low %v530, %v537
    %v628 = vunpack.c.l.s4 1983009808
    %v629 = vunpack.c.0.s8 %v628
    %v630 = vlaneseq
    %v631 = vshrl.u32 %v630, 7
    %v632 = vsub.s32 %v629, %v631
    %v633 = vrot.slane %v626, %v632
    %v634 = vcombine.low %v554, %v555
    %v636 = vunpack.c.l.s4 1983009808
    %v637 = vunpack.c.0.s8 %v636
    %v638 = vlaneseq
    %v639 = vshrl.u32 %v638, 7
    %v640 = vsub.s32 %v637, %v639
    %v641 = vrot.slane %v634, %v640
    %v642 = vcombine.low %v546, %v553
    %v644 = vunpack.c.l.s4 1983009808
    %v645 = vunpack.c.0.s8 %v644
    %v646 = vlaneseq
    %v647 = vshrl.u32 %v646, 7
    %v648 = vsub.s32 %v645, %v647
    %v649 = vrot.slane %v642, %v648
    %v650 = vcombine.low %v556, %v557
    %v652 = vunpack.c.l.s4 1983009808
    %v653 = vunpack.c.0.s8 %v652
    %v654 = vlaneseq
    %v655 = vshrl.u32 %v654, 7
    %v656 = vsub.s32 %v653, %v655
    %v657 = vrot.slane %v650, %v656
    %v658 = vcombine.low %v633, %v641
    %v659 = vcombine.high %v633, %v641
    %v661 = vunpack.c.l.s4 1934713408
    %v662 = vunpack.c.0.s8 %v661
    %v663 = vlaneseq
    %v664 = vshrl.u32 %v663, 7
    %v665 = vsub.s32 %v662, %v664
    %v666 = vrot.slane %v658, %v665
    %v668 = vunpack.c.l.s4 1934713408
    %v669 = vunpack.c.0.s8 %v668
    %v670 = vlaneseq
    %v671 = vshrl.u32 %v670, 7
    %v672 = vsub.s32 %v669, %v671
    %v673 = vrot.slane %v659, %v672
    %v674 = vcombine.low %v649, %v657
    %v675 = vcombine.high %v649, %v657
    %v677 = vunpack.c.l.s4 1934713408
    %v678 = vunpack.c.0.s8 %v677
    %v679 = vlaneseq
    %v680 = vshrl.u32 %v679, 7
    %v681 = vsub.s32 %v678, %v680
    %v682 = vrot.slane %v674, %v681
    %v684 = vunpack.c.l.s4 1934713408
    %v685 = vunpack.c.0.s8 %v684
    %v686 = vlaneseq
    %v687 = vshrl.u32 %v686, 7
    %v688 = vsub.s32 %v685, %v687
    %v689 = vrot.slane %v675, %v688
    %v690 = vcombine.low %v666, %v682
    %v691 = vcombine.high %v666, %v682
    %v692 = vcombine.low %v673, %v689
    %v693 = vcombine.high %v673, %v689
    %696 = vrot.lane.b32.xlu0 %v355, 96
    %v697 = vpop.permute.xlu0 %696
    %698 = vrot.lane.b32.xlu0 %v359, 96
    %v699 = vpop.permute.xlu0 %698
    %702 = vrot.lane.b32.xlu0 %v355, 64
    %v703 = vpop.permute.xlu0 %702
    %704 = vrot.lane.b32.xlu0 %v359, 64
    %v705 = vpop.permute.xlu0 %704
    %708 = vrot.lane.b32.xlu0 %v355, 32
    %v709 = vpop.permute.xlu0 %708
    %710 = vrot.lane.b32.xlu0 %v359, 32
    %v711 = vpop.permute.xlu0 %710
    %v714 = vcombine.low %v355, %v703
    %v715 = vcombine.high %v355, %v703
    %v717 = vunpack.c.l.s4 1983009808
    %v718 = vunpack.c.0.s8 %v717
    %v719 = vlaneseq
    %v720 = vshrl.u32 %v719, 7
    %v721 = vsub.s32 %v718, %v720
    %v722 = vrot.slane %v714, %v721
    %v724 = vunpack.c.l.s4 1983009808
    %v725 = vunpack.c.0.s8 %v724
    %v726 = vlaneseq
    %v727 = vshrl.u32 %v726, 7
    %v728 = vsub.s32 %v725, %v727
    %v729 = vrot.slane %v715, %v728
    %v730 = vcombine.low %v697, %v709
    %v731 = vcombine.high %v697, %v709
    %v733 = vunpack.c.l.s4 1983009808
    %v734 = vunpack.c.0.s8 %v733
    %v735 = vlaneseq
    %v736 = vshrl.u32 %v735, 7
    %v737 = vsub.s32 %v734, %v736
    %v738 = vrot.slane %v730, %v737
    %v740 = vunpack.c.l.s4 1983009808
    %v741 = vunpack.c.0.s8 %v740
    %v742 = vlaneseq
    %v743 = vshrl.u32 %v742, 7
    %v744 = vsub.s32 %v741, %v743
    %v745 = vrot.slane %v731, %v744
    %v746 = vcombine.low %v722, %v738
    %v747 = vcombine.high %v722, %v738
    %v749 = vunpack.c.l.s4 1934713408
    %v750 = vunpack.c.0.s8 %v749
    %v751 = vlaneseq
    %v752 = vshrl.u32 %v751, 7
    %v753 = vsub.s32 %v750, %v752
    %v754 = vrot.slane %v746, %v753
    %v756 = vunpack.c.l.s4 1934713408
    %v757 = vunpack.c.0.s8 %v756
    %v758 = vlaneseq
    %v759 = vshrl.u32 %v758, 7
    %v760 = vsub.s32 %v757, %v759
    %v761 = vrot.slane %v747, %v760
    %v762 = vcombine.low %v729, %v745
    %v763 = vcombine.high %v729, %v745
    %v765 = vunpack.c.l.s4 1934713408
    %v766 = vunpack.c.0.s8 %v765
    %v767 = vlaneseq
    %v768 = vshrl.u32 %v767, 7
    %v769 = vsub.s32 %v766, %v768
    %v770 = vrot.slane %v762, %v769
    %v772 = vunpack.c.l.s4 1934713408
    %v773 = vunpack.c.0.s8 %v772
    %v774 = vlaneseq
    %v775 = vshrl.u32 %v774, 7
    %v776 = vsub.s32 %v773, %v775
    %v777 = vrot.slane %v763, %v776
    %v778 = vcombine.high %v754, 0.0
    %v779 = vcombine.high %v761, 0.0
    %v780 = vcombine.high %v770, 0.0
    %v781 = vcombine.high %v777, 0.0
    %v782 = vcombine.low %v359, %v705
    %v783 = vcombine.high %v359, %v705
    %v785 = vunpack.c.l.s4 1983009808
    %v786 = vunpack.c.0.s8 %v785
    %v787 = vlaneseq
    %v788 = vshrl.u32 %v787, 7
    %v789 = vsub.s32 %v786, %v788
    %v790 = vrot.slane %v782, %v789
    %v792 = vunpack.c.l.s4 1983009808
    %v793 = vunpack.c.0.s8 %v792
    %v794 = vlaneseq
    %v795 = vshrl.u32 %v794, 7
    %v796 = vsub.s32 %v793, %v795
    %v797 = vrot.slane %v783, %v796
    %v798 = vcombine.low %v699, %v711
    %v799 = vcombine.high %v699, %v711
    %v801 = vunpack.c.l.s4 1983009808
    %v802 = vunpack.c.0.s8 %v801
    %v803 = vlaneseq
    %v804 = vshrl.u32 %v803, 7
    %v805 = vsub.s32 %v802, %v804
    %v806 = vrot.slane %v798, %v805
    %v808 = vunpack.c.l.s4 1983009808
    %v809 = vunpack.c.0.s8 %v808
    %v810 = vlaneseq
    %v811 = vshrl.u32 %v810, 7
    %v812 = vsub.s32 %v809, %v811
    %v813 = vrot.slane %v799, %v812
    %v814 = vcombine.low %v790, %v806
    %v815 = vcombine.high %v790, %v806
    %v817 = vunpack.c.l.s4 1934713408
    %v818 = vunpack.c.0.s8 %v817
    %v819 = vlaneseq
    %v820 = vshrl.u32 %v819, 7
    %v821 = vsub.s32 %v818, %v820
    %v822 = vrot.slane %v814, %v821
    %v824 = vunpack.c.l.s4 1934713408
    %v825 = vunpack.c.0.s8 %v824
    %v826 = vlaneseq
    %v827 = vshrl.u32 %v826, 7
    %v828 = vsub.s32 %v825, %v827
    %v829 = vrot.slane %v815, %v828
    %v830 = vcombine.low %v797, %v813
    %v831 = vcombine.high %v797, %v813
    %v833 = vunpack.c.l.s4 1934713408
    %v834 = vunpack.c.0.s8 %v833
    %v835 = vlaneseq
    %v836 = vshrl.u32 %v835, 7
    %v837 = vsub.s32 %v834, %v836
    %v838 = vrot.slane %v830, %v837
    %v840 = vunpack.c.l.s4 1934713408
    %v841 = vunpack.c.0.s8 %v840
    %v842 = vlaneseq
    %v843 = vshrl.u32 %v842, 7
    %v844 = vsub.s32 %v841, %v843
    %v845 = vrot.slane %v831, %v844
    %v846 = vcombine.high %v822, 0.0
    %v847 = vcombine.high %v829, 0.0
    %v848 = vcombine.high %v838, 0.0
    %v849 = vcombine.high %v845, 0.0
    %v850 = vcombine.low %v754, %v761
    %v852 = vunpack.c.l.s4 1983009808
    %v853 = vunpack.c.0.s8 %v852
    %v854 = vlaneseq
    %v855 = vshrl.u32 %v854, 7
    %v856 = vsub.s32 %v853, %v855
    %v857 = vrot.slane %v850, %v856
    %v858 = vcombine.low %v778, %v779
    %v860 = vunpack.c.l.s4 1983009808
    %v861 = vunpack.c.0.s8 %v860
    %v862 = vlaneseq
    %v863 = vshrl.u32 %v862, 7
    %v864 = vsub.s32 %v861, %v863
    %v865 = vrot.slane %v858, %v864
    %v866 = vcombine.low %v770, %v777
    %v868 = vunpack.c.l.s4 1983009808
    %v869 = vunpack.c.0.s8 %v868
    %v870 = vlaneseq
    %v871 = vshrl.u32 %v870, 7
    %v872 = vsub.s32 %v869, %v871
    %v873 = vrot.slane %v866, %v872
    %v874 = vcombine.low %v780, %v781
    %v876 = vunpack.c.l.s4 1983009808
    %v877 = vunpack.c.0.s8 %v876
    %v878 = vlaneseq
    %v879 = vshrl.u32 %v878, 7
    %v880 = vsub.s32 %v877, %v879
    %v881 = vrot.slane %v874, %v880
    %v882 = vcombine.low %v857, %v865
    %v883 = vcombine.high %v857, %v865
    %v885 = vunpack.c.l.s4 1934713408
    %v886 = vunpack.c.0.s8 %v885
    %v887 = vlaneseq
    %v888 = vshrl.u32 %v887, 7
    %v889 = vsub.s32 %v886, %v888
    %v890 = vrot.slane %v882, %v889
    %v892 = vunpack.c.l.s4 1934713408
    %v893 = vunpack.c.0.s8 %v892
    %v894 = vlaneseq
    %v895 = vshrl.u32 %v894, 7
    %v896 = vsub.s32 %v893, %v895
    %v897 = vrot.slane %v883, %v896
    %v898 = vcombine.low %v873, %v881
    %v899 = vcombine.high %v873, %v881
    %v901 = vunpack.c.l.s4 1934713408
    %v902 = vunpack.c.0.s8 %v901
    %v903 = vlaneseq
    %v904 = vshrl.u32 %v903, 7
    %v905 = vsub.s32 %v902, %v904
    %v906 = vrot.slane %v898, %v905
    %v908 = vunpack.c.l.s4 1934713408
    %v909 = vunpack.c.0.s8 %v908
    %v910 = vlaneseq
    %v911 = vshrl.u32 %v910, 7
    %v912 = vsub.s32 %v909, %v911
    %v913 = vrot.slane %v899, %v912
    %v914 = vcombine.low %v890, %v906
    %v915 = vcombine.high %v890, %v906
    %v916 = vcombine.low %v897, %v913
    %v917 = vcombine.high %v897, %v913
    %v918 = vcombine.low %v822, %v829
    %v920 = vunpack.c.l.s4 1983009808
    %v921 = vunpack.c.0.s8 %v920
    %v922 = vlaneseq
    %v923 = vshrl.u32 %v922, 7
    %v924 = vsub.s32 %v921, %v923
    %v925 = vrot.slane %v918, %v924
    %v926 = vcombine.low %v846, %v847
    %v928 = vunpack.c.l.s4 1983009808
    %v929 = vunpack.c.0.s8 %v928
    %v930 = vlaneseq
    %v931 = vshrl.u32 %v930, 7
    %v932 = vsub.s32 %v929, %v931
    %v933 = vrot.slane %v926, %v932
    %v934 = vcombine.low %v838, %v845
    %v936 = vunpack.c.l.s4 1983009808
    %v937 = vunpack.c.0.s8 %v936
    %v938 = vlaneseq
    %v939 = vshrl.u32 %v938, 7
    %v940 = vsub.s32 %v937, %v939
    %v941 = vrot.slane %v934, %v940
    %v942 = vcombine.low %v848, %v849
    %v944 = vunpack.c.l.s4 1983009808
    %v945 = vunpack.c.0.s8 %v944
    %v946 = vlaneseq
    %v947 = vshrl.u32 %v946, 7
    %v948 = vsub.s32 %v945, %v947
    %v949 = vrot.slane %v942, %v948
    %v950 = vcombine.low %v925, %v933
    %v951 = vcombine.high %v925, %v933
    %v953 = vunpack.c.l.s4 1934713408
    %v954 = vunpack.c.0.s8 %v953
    %v955 = vlaneseq
    %v956 = vshrl.u32 %v955, 7
    %v957 = vsub.s32 %v954, %v956
    %v958 = vrot.slane %v950, %v957
    %v960 = vunpack.c.l.s4 1934713408
    %v961 = vunpack.c.0.s8 %v960
    %v962 = vlaneseq
    %v963 = vshrl.u32 %v962, 7
    %v964 = vsub.s32 %v961, %v963
    %v965 = vrot.slane %v951, %v964
    %v966 = vcombine.low %v941, %v949
    %v967 = vcombine.high %v941, %v949
    %v969 = vunpack.c.l.s4 1934713408
    %v970 = vunpack.c.0.s8 %v969
    %v971 = vlaneseq
    %v972 = vshrl.u32 %v971, 7
    %v973 = vsub.s32 %v970, %v972
    %v974 = vrot.slane %v966, %v973
    %v976 = vunpack.c.l.s4 1934713408
    %v977 = vunpack.c.0.s8 %v976
    %v978 = vlaneseq
    %v979 = vshrl.u32 %v978, 7
    %v980 = vsub.s32 %v977, %v979
    %v981 = vrot.slane %v967, %v980
    %v982 = vcombine.low %v958, %v974
    %v983 = vcombine.high %v958, %v974
    %v984 = vcombine.low %v965, %v981
    %v985 = vcombine.high %v965, %v981
    %988 = vrot.lane.b32.xlu0 %v396, 96
    %v989 = vpop.permute.xlu0 %988
    %990 = vrot.lane.b32.xlu0 %v399, 96
    %v991 = vpop.permute.xlu0 %990
    %994 = vrot.lane.b32.xlu0 %v396, 64
    %v995 = vpop.permute.xlu0 %994
    %996 = vrot.lane.b32.xlu0 %v399, 64
    %v997 = vpop.permute.xlu0 %996
    %1000 = vrot.lane.b32.xlu0 %v396, 32
    %v1001 = vpop.permute.xlu0 %1000
    %1002 = vrot.lane.b32.xlu0 %v399, 32
    %v1003 = vpop.permute.xlu0 %1002
    %v1006 = vcombine.low %v396, %v995
    %v1007 = vcombine.high %v396, %v995
    %v1009 = vunpack.c.l.s4 1983009808
    %v1010 = vunpack.c.0.s8 %v1009
    %v1011 = vlaneseq
    %v1012 = vshrl.u32 %v1011, 7
    %v1013 = vsub.s32 %v1010, %v1012
    %v1014 = vrot.slane %v1006, %v1013
    %v1016 = vunpack.c.l.s4 1983009808
    %v1017 = vunpack.c.0.s8 %v1016
    %v1018 = vlaneseq
    %v1019 = vshrl.u32 %v1018, 7
    %v1020 = vsub.s32 %v1017, %v1019
    %v1021 = vrot.slane %v1007, %v1020
    %v1022 = vcombine.low %v989, %v1001
    %v1023 = vcombine.high %v989, %v1001
    %v1025 = vunpack.c.l.s4 1983009808
    %v1026 = vunpack.c.0.s8 %v1025
    %v1027 = vlaneseq
    %v1028 = vshrl.u32 %v1027, 7
    %v1029 = vsub.s32 %v1026, %v1028
    %v1030 = vrot.slane %v1022, %v1029
    %v1032 = vunpack.c.l.s4 1983009808
    %v1033 = vunpack.c.0.s8 %v1032
    %v1034 = vlaneseq
    %v1035 = vshrl.u32 %v1034, 7
    %v1036 = vsub.s32 %v1033, %v1035
    %v1037 = vrot.slane %v1023, %v1036
    %v1038 = vcombine.low %v1014, %v1030
    %v1039 = vcombine.high %v1014, %v1030
    %v1041 = vunpack.c.l.s4 1934713408
    %v1042 = vunpack.c.0.s8 %v1041
    %v1043 = vlaneseq
    %v1044 = vshrl.u32 %v1043, 7
    %v1045 = vsub.s32 %v1042, %v1044
    %v1046 = vrot.slane %v1038, %v1045
    %v1048 = vunpack.c.l.s4 1934713408
    %v1049 = vunpack.c.0.s8 %v1048
    %v1050 = vlaneseq
    %v1051 = vshrl.u32 %v1050, 7
    %v1052 = vsub.s32 %v1049, %v1051
    %v1053 = vrot.slane %v1039, %v1052
    %v1054 = vcombine.low %v1021, %v1037
    %v1055 = vcombine.high %v1021, %v1037
    %v1057 = vunpack.c.l.s4 1934713408
    %v1058 = vunpack.c.0.s8 %v1057
    %v1059 = vlaneseq
    %v1060 = vshrl.u32 %v1059, 7
    %v1061 = vsub.s32 %v1058, %v1060
    %v1062 = vrot.slane %v1054, %v1061
    %v1064 = vunpack.c.l.s4 1934713408
    %v1065 = vunpack.c.0.s8 %v1064
    %v1066 = vlaneseq
    %v1067 = vshrl.u32 %v1066, 7
    %v1068 = vsub.s32 %v1065, %v1067
    %v1069 = vrot.slane %v1055, %v1068
    %v1070 = vcombine.high %v1046, 0.0
    %v1071 = vcombine.high %v1053, 0.0
    %v1072 = vcombine.high %v1062, 0.0
    %v1073 = vcombine.high %v1069, 0.0
    %v1074 = vcombine.low %v399, %v997
    %v1075 = vcombine.high %v399, %v997
    %v1077 = vunpack.c.l.s4 1983009808
    %v1078 = vunpack.c.0.s8 %v1077
    %v1079 = vlaneseq
    %v1080 = vshrl.u32 %v1079, 7
    %v1081 = vsub.s32 %v1078, %v1080
    %v1082 = vrot.slane %v1074, %v1081
    %v1084 = vunpack.c.l.s4 1983009808
    %v1085 = vunpack.c.0.s8 %v1084
    %v1086 = vlaneseq
    %v1087 = vshrl.u32 %v1086, 7
    %v1088 = vsub.s32 %v1085, %v1087
    %v1089 = vrot.slane %v1075, %v1088
    %v1090 = vcombine.low %v991, %v1003
    %v1091 = vcombine.high %v991, %v1003
    %v1093 = vunpack.c.l.s4 1983009808
    %v1094 = vunpack.c.0.s8 %v1093
    %v1095 = vlaneseq
    %v1096 = vshrl.u32 %v1095, 7
    %v1097 = vsub.s32 %v1094, %v1096
    %v1098 = vrot.slane %v1090, %v1097
    %v1100 = vunpack.c.l.s4 1983009808
    %v1101 = vunpack.c.0.s8 %v1100
    %v1102 = vlaneseq
    %v1103 = vshrl.u32 %v1102, 7
    %v1104 = vsub.s32 %v1101, %v1103
    %v1105 = vrot.slane %v1091, %v1104
    %v1106 = vcombine.low %v1082, %v1098
    %v1107 = vcombine.high %v1082, %v1098
    %v1109 = vunpack.c.l.s4 1934713408
    %v1110 = vunpack.c.0.s8 %v1109
    %v1111 = vlaneseq
    %v1112 = vshrl.u32 %v1111, 7
    %v1113 = vsub.s32 %v1110, %v1112
    %v1114 = vrot.slane %v1106, %v1113
    %v1116 = vunpack.c.l.s4 1934713408
    %v1117 = vunpack.c.0.s8 %v1116
    %v1118 = vlaneseq
    %v1119 = vshrl.u32 %v1118, 7
    %v1120 = vsub.s32 %v1117, %v1119
    %v1121 = vrot.slane %v1107, %v1120
    %v1122 = vcombine.low %v1089, %v1105
    %v1123 = vcombine.high %v1089, %v1105
    %v1125 = vunpack.c.l.s4 1934713408
    %v1126 = vunpack.c.0.s8 %v1125
    %v1127 = vlaneseq
    %v1128 = vshrl.u32 %v1127, 7
    %v1129 = vsub.s32 %v1126, %v1128
    %v1130 = vrot.slane %v1122, %v1129
    %v1132 = vunpack.c.l.s4 1934713408
    %v1133 = vunpack.c.0.s8 %v1132
    %v1134 = vlaneseq
    %v1135 = vshrl.u32 %v1134, 7
    %v1136 = vsub.s32 %v1133, %v1135
    %v1137 = vrot.slane %v1123, %v1136
    %v1138 = vcombine.high %v1114, 0.0
    %v1139 = vcombine.high %v1121, 0.0
    %v1140 = vcombine.high %v1130, 0.0
    %v1141 = vcombine.high %v1137, 0.0
    %v1142 = vcombine.low %v1046, %v1053
    %v1144 = vunpack.c.l.s4 1983009808
    %v1145 = vunpack.c.0.s8 %v1144
    %v1146 = vlaneseq
    %v1147 = vshrl.u32 %v1146, 7
    %v1148 = vsub.s32 %v1145, %v1147
    %v1149 = vrot.slane %v1142, %v1148
    %v1150 = vcombine.low %v1070, %v1071
    %v1152 = vunpack.c.l.s4 1983009808
    %v1153 = vunpack.c.0.s8 %v1152
    %v1154 = vlaneseq
    %v1155 = vshrl.u32 %v1154, 7
    %v1156 = vsub.s32 %v1153, %v1155
    %v1157 = vrot.slane %v1150, %v1156
    %v1158 = vcombine.low %v1062, %v1069
    %v1160 = vunpack.c.l.s4 1983009808
    %v1161 = vunpack.c.0.s8 %v1160
    %v1162 = vlaneseq
    %v1163 = vshrl.u32 %v1162, 7
    %v1164 = vsub.s32 %v1161, %v1163
    %v1165 = vrot.slane %v1158, %v1164
    %v1166 = vcombine.low %v1072, %v1073
    %v1168 = vunpack.c.l.s4 1983009808
    %v1169 = vunpack.c.0.s8 %v1168
    %v1170 = vlaneseq
    %v1171 = vshrl.u32 %v1170, 7
    %v1172 = vsub.s32 %v1169, %v1171
    %v1173 = vrot.slane %v1166, %v1172
    %v1174 = vcombine.low %v1149, %v1157
    %v1175 = vcombine.high %v1149, %v1157
    %v1177 = vunpack.c.l.s4 1934713408
    %v1178 = vunpack.c.0.s8 %v1177
    %v1179 = vlaneseq
    %v1180 = vshrl.u32 %v1179, 7
    %v1181 = vsub.s32 %v1178, %v1180
    %v1182 = vrot.slane %v1174, %v1181
    %v1184 = vunpack.c.l.s4 1934713408
    %v1185 = vunpack.c.0.s8 %v1184
    %v1186 = vlaneseq
    %v1187 = vshrl.u32 %v1186, 7
    %v1188 = vsub.s32 %v1185, %v1187
    %v1189 = vrot.slane %v1175, %v1188
    %v1190 = vcombine.low %v1165, %v1173
    %v1191 = vcombine.high %v1165, %v1173
    %v1193 = vunpack.c.l.s4 1934713408
    %v1194 = vunpack.c.0.s8 %v1193
    %v1195 = vlaneseq
    %v1196 = vshrl.u32 %v1195, 7
    %v1197 = vsub.s32 %v1194, %v1196
    %v1198 = vrot.slane %v1190, %v1197
    %v1200 = vunpack.c.l.s4 1934713408
    %v1201 = vunpack.c.0.s8 %v1200
    %v1202 = vlaneseq
    %v1203 = vshrl.u32 %v1202, 7
    %v1204 = vsub.s32 %v1201, %v1203
    %v1205 = vrot.slane %v1191, %v1204
    %v1206 = vcombine.low %v1182, %v1198
    %v1207 = vcombine.high %v1182, %v1198
    %v1208 = vcombine.low %v1189, %v1205
    %v1209 = vcombine.high %v1189, %v1205
    %v1210 = vcombine.low %v1114, %v1121
    %v1212 = vunpack.c.l.s4 1983009808
    %v1213 = vunpack.c.0.s8 %v1212
    %v1214 = vlaneseq
    %v1215 = vshrl.u32 %v1214, 7
    %v1216 = vsub.s32 %v1213, %v1215
    %v1217 = vrot.slane %v1210, %v1216
    %v1218 = vcombine.low %v1138, %v1139
    %v1220 = vunpack.c.l.s4 1983009808
    %v1221 = vunpack.c.0.s8 %v1220
    %v1222 = vlaneseq
    %v1223 = vshrl.u32 %v1222, 7
    %v1224 = vsub.s32 %v1221, %v1223
    %v1225 = vrot.slane %v1218, %v1224
    %v1226 = vcombine.low %v1130, %v1137
    %v1228 = vunpack.c.l.s4 1983009808
    %v1229 = vunpack.c.0.s8 %v1228
    %v1230 = vlaneseq
    %v1231 = vshrl.u32 %v1230, 7
    %v1232 = vsub.s32 %v1229, %v1231
    %v1233 = vrot.slane %v1226, %v1232
    %v1234 = vcombine.low %v1140, %v1141
    %v1236 = vunpack.c.l.s4 1983009808
    %v1237 = vunpack.c.0.s8 %v1236
    %v1238 = vlaneseq
    %v1239 = vshrl.u32 %v1238, 7
    %v1240 = vsub.s32 %v1237, %v1239
    %v1241 = vrot.slane %v1234, %v1240
    %v1242 = vcombine.low %v1217, %v1225
    %v1243 = vcombine.high %v1217, %v1225
    %v1245 = vunpack.c.l.s4 1934713408
    %v1246 = vunpack.c.0.s8 %v1245
    %v1247 = vlaneseq
    %v1248 = vshrl.u32 %v1247, 7
    %v1249 = vsub.s32 %v1246, %v1248
    %v1250 = vrot.slane %v1242, %v1249
    %v1252 = vunpack.c.l.s4 1934713408
    %v1253 = vunpack.c.0.s8 %v1252
    %v1254 = vlaneseq
    %v1255 = vshrl.u32 %v1254, 7
    %v1256 = vsub.s32 %v1253, %v1255
    %v1257 = vrot.slane %v1243, %v1256
    %v1258 = vcombine.low %v1233, %v1241
    %v1259 = vcombine.high %v1233, %v1241
    %v1261 = vunpack.c.l.s4 1934713408
    %v1262 = vunpack.c.0.s8 %v1261
    %v1263 = vlaneseq
    %v1264 = vshrl.u32 %v1263, 7
    %v1265 = vsub.s32 %v1262, %v1264
    %v1266 = vrot.slane %v1258, %v1265
    %v1268 = vunpack.c.l.s4 1934713408
    %v1269 = vunpack.c.0.s8 %v1268
    %v1270 = vlaneseq
    %v1271 = vshrl.u32 %v1270, 7
    %v1272 = vsub.s32 %v1269, %v1271
    %v1273 = vrot.slane %v1259, %v1272
    %v1274 = vcombine.low %v1250, %v1266
    %v1275 = vcombine.high %v1250, %v1266
    %v1276 = vcombine.low %v1257, %v1273
    %v1277 = vcombine.high %v1257, %v1273
    %v1278 = vld [vmem:[#allocation7] sm:$0xff]
    %v1279 = vld [vmem:[#allocation7 + $0x8] sm:$0xff]
    %v1280 = vld [vmem:[#allocation8] sm:$0xff]
    %v1281 = vld [vmem:[#allocation8 + $0x8] sm:$0xff]
    %v1282 = vsub.f32 0.0, %v622
    %v1283 = vsub.f32 0.0, %v690
    %v1284 = vsub.f32 0.0, %v623
    %v1285 = vsub.f32 0.0, %v691
    %v1286 = vsub.f32 0.0, %v624
    %v1287 = vsub.f32 0.0, %v692
    %v1288 = vsub.f32 0.0, %v625
    %v1289 = vsub.f32 0.0, %v693
    %1298 = vrot.lane.b32.xlu0 %v1282, 112
    %v1299 = vpop.permute.xlu0 %1298
    %1300 = vrot.lane.b32.xlu0 %v1283, 112
    %v1301 = vpop.permute.xlu0 %1300
    %1302 = vrot.lane.b32.xlu0 %v1284, 112
    %v1303 = vpop.permute.xlu0 %1302
    %1304 = vrot.lane.b32.xlu0 %v1285, 112
    %v1305 = vpop.permute.xlu0 %1304
    %1306 = vrot.lane.b32.xlu0 %v1286, 112
    %v1307 = vpop.permute.xlu0 %1306
    %1308 = vrot.lane.b32.xlu0 %v1287, 112
    %v1309 = vpop.permute.xlu0 %1308
    %1310 = vrot.lane.b32.xlu0 %v1288, 112
    %v1311 = vpop.permute.xlu0 %1310
    %1312 = vrot.lane.b32.xlu0 %v1289, 112
    %v1313 = vpop.permute.xlu0 %1312
    %1330 = vrot.lane.b32.xlu0 %v622, 16
    %v1331 = vpop.permute.xlu0 %1330
    %1332 = vrot.lane.b32.xlu0 %v690, 16
    %v1333 = vpop.permute.xlu0 %1332
    %1334 = vrot.lane.b32.xlu0 %v623, 16
    %v1335 = vpop.permute.xlu0 %1334
    %1336 = vrot.lane.b32.xlu0 %v691, 16
    %v1337 = vpop.permute.xlu0 %1336
    %1338 = vrot.lane.b32.xlu0 %v624, 16
    %v1339 = vpop.permute.xlu0 %1338
    %1340 = vrot.lane.b32.xlu0 %v692, 16
    %v1341 = vpop.permute.xlu0 %1340
    %1342 = vrot.lane.b32.xlu0 %v625, 16
    %v1343 = vpop.permute.xlu0 %1342
    %1344 = vrot.lane.b32.xlu0 %v693, 16
    %v1345 = vpop.permute.xlu0 %1344
    %vm1354 = vcmask 130048
    %v1355 = vsel %vm1354, %v1299, %v1331
    %v1356 = vsel %vm1354, %v1301, %v1333
    %v1357 = vsel %vm1354, %v1303, %v1335
    %v1358 = vsel %vm1354, %v1305, %v1337
    %v1359 = vsel %vm1354, %v1307, %v1339
    %v1360 = vsel %vm1354, %v1309, %v1341
    %v1361 = vsel %vm1354, %v1311, %v1343
    %v1362 = vsel %vm1354, %v1313, %v1345
    %v1363 = vmul.f32 %v622, %v1278
    %v1364 = vmul.f32 %v690, %v1279
    %v1365 = vmul.f32 %v623, %v1278
    %v1366 = vmul.f32 %v691, %v1279
    %v1367 = vmul.f32 %v624, %v1278
    %v1368 = vmul.f32 %v692, %v1279
    %v1369 = vmul.f32 %v625, %v1278
    %v1370 = vmul.f32 %v693, %v1279
    %v1371 = vmul.f32 %v1355, %v1280
    %v1372 = vmul.f32 %v1356, %v1281
    %v1373 = vmul.f32 %v1357, %v1280
    %v1374 = vmul.f32 %v1358, %v1281
    %v1375 = vmul.f32 %v1359, %v1280
    %v1376 = vmul.f32 %v1360, %v1281
    %v1377 = vmul.f32 %v1361, %v1280
    %v1378 = vmul.f32 %v1362, %v1281
    %v1379 = vadd.f32 %v1363, %v1371
    %v1380 = vadd.f32 %v1364, %v1372
    %v1381 = vadd.f32 %v1365, %v1373
    %v1382 = vadd.f32 %v1366, %v1374
    %v1383 = vadd.f32 %v1367, %v1375
    %v1384 = vadd.f32 %v1368, %v1376
    %v1385 = vadd.f32 %v1369, %v1377
    %v1386 = vadd.f32 %v1370, %v1378
    %v1387 = vsub.f32 0.0, %v914
    %v1388 = vsub.f32 0.0, %v982
    %v1389 = vsub.f32 0.0, %v915
    %v1390 = vsub.f32 0.0, %v983
    %v1391 = vsub.f32 0.0, %v916
    %v1392 = vsub.f32 0.0, %v984
    %v1393 = vsub.f32 0.0, %v917
    %v1394 = vsub.f32 0.0, %v985
    %1403 = vrot.lane.b32.xlu0 %v1387, 112
    %v1404 = vpop.permute.xlu0 %1403
    %1405 = vrot.lane.b32.xlu0 %v1388, 112
    %v1406 = vpop.permute.xlu0 %1405
    %1407 = vrot.lane.b32.xlu0 %v1389, 112
    %v1408 = vpop.permute.xlu0 %1407
    %1409 = vrot.lane.b32.xlu0 %v1390, 112
    %v1410 = vpop.permute.xlu0 %1409
    %1411 = vrot.lane.b32.xlu0 %v1391, 112
    %v1412 = vpop.permute.xlu0 %1411
    %1413 = vrot.lane.b32.xlu0 %v1392, 112
    %v1414 = vpop.permute.xlu0 %1413
    %1415 = vrot.lane.b32.xlu0 %v1393, 112
    %v1416 = vpop.permute.xlu0 %1415
    %1417 = vrot.lane.b32.xlu0 %v1394, 112
    %v1418 = vpop.permute.xlu0 %1417
    %1435 = vrot.lane.b32.xlu0 %v914, 16
    %v1436 = vpop.permute.xlu0 %1435
    %1437 = vrot.lane.b32.xlu0 %v982, 16
    %v1438 = vpop.permute.xlu0 %1437
    %1439 = vrot.lane.b32.xlu0 %v915, 16
    %v1440 = vpop.permute.xlu0 %1439
    %1441 = vrot.lane.b32.xlu0 %v983, 16
    %v1442 = vpop.permute.xlu0 %1441
    %1443 = vrot.lane.b32.xlu0 %v916, 16
    %v1444 = vpop.permute.xlu0 %1443
    %1445 = vrot.lane.b32.xlu0 %v984, 16
    %v1446 = vpop.permute.xlu0 %1445
    %1447 = vrot.lane.b32.xlu0 %v917, 16
    %v1448 = vpop.permute.xlu0 %1447
    %1449 = vrot.lane.b32.xlu0 %v985, 16
    %v1450 = vpop.permute.xlu0 %1449
    %v1459 = vsel %vm1354, %v1404, %v1436
    %v1460 = vsel %vm1354, %v1406, %v1438
    %v1461 = vsel %vm1354, %v1408, %v1440
    %v1462 = vsel %vm1354, %v1410, %v1442
    %v1463 = vsel %vm1354, %v1412, %v1444
    %v1464 = vsel %vm1354, %v1414, %v1446
    %v1465 = vsel %vm1354, %v1416, %v1448
    %v1466 = vsel %vm1354, %v1418, %v1450
    %v1467 = vmul.f32 %v914, %v1278
    %v1468 = vmul.f32 %v982, %v1279
    %v1469 = vmul.f32 %v915, %v1278
    %v1470 = vmul.f32 %v983, %v1279
    %v1471 = vmul.f32 %v916, %v1278
    %v1472 = vmul.f32 %v984, %v1279
    %v1473 = vmul.f32 %v917, %v1278
    %v1474 = vmul.f32 %v985, %v1279
    %v1475 = vmul.f32 %v1459, %v1280
    %v1476 = vmul.f32 %v1460, %v1281
    %v1477 = vmul.f32 %v1461, %v1280
    %v1478 = vmul.f32 %v1462, %v1281
    %v1479 = vmul.f32 %v1463, %v1280
    %v1480 = vmul.f32 %v1464, %v1281
    %v1481 = vmul.f32 %v1465, %v1280
    %v1482 = vmul.f32 %v1466, %v1281
    %v1483 = vadd.f32 %v1467, %v1475
    %v1484 = vadd.f32 %v1468, %v1476
    %v1485 = vadd.f32 %v1469, %v1477
    %v1486 = vadd.f32 %v1470, %v1478
    %v1487 = vadd.f32 %v1471, %v1479
    %v1488 = vadd.f32 %v1472, %v1480
    %v1489 = vadd.f32 %v1473, %v1481
    %v1490 = vadd.f32 %v1474, %v1482
    %v1491 = vld [vmem:[#allocation10] sm:$0xff]
    %v1492 = vld [vmem:[#allocation10 + $0x8] sm:$0xff]
    %vm1493 = vcmask 261120
    %v1495 = vsel %vm1493, %v1379, 0
    %v1498 = vsel %vm1493, %v1380, 0
    %v1501 = vsel %vm1493, %v1483, 0
    %v1504 = vsel %vm1493, %v1484, 0
    %1506 = vmatprep.subr.mxu0 0.0
    %1507 = vmatpush1.xpose.msra.mxu0 %v1501
    %1508 = vmatprep.subr.mxu0 0.0
    %1509 = vmatpush1.xpose.msra.mxu0 %v1504
    %1510 = vmatprep.subr.mxu0 0.0
    %1511 = vmatpush1.xpose.msra.mxu0 0.0
    %1512 = vmatprep.subr.mxu0 0.0
    %1513 = vmatpush1.xpose.msra.mxu0 0.0
    %1514 = vmatprep.subr.mxu0 0.0
    %1515 = vmatpush1.xpose.msra.mxu0 0.0
    %1516 = vmatprep.subr.mxu0 0.0
    %1517 = vmatpush1.xpose.msra.mxu0 0.0
    %1518 = vmatprep.subr.mxu0 0.0
    %1519 = vmatpush1.xpose.msra.mxu0 0.0
    %1520 = vmatprep.subr.mxu0 0.0
    %1521 = vmatpush1.xpose.msra.mxu0 0.0
    %1522 = vmatprep.subr.mxu0 0.0
    %1523 = vmatpush1.xpose.msra.mxu0 0.0
    %1524 = vmatprep.subr.mxu0 0.0
    %1525 = vmatpush1.xpose.msra.mxu0 0.0
    %1526 = vmatprep.subr.mxu0 0.0
    %1527 = vmatpush1.xpose.msra.mxu0 0.0
    %1528 = vmatprep.subr.mxu0 0.0
    %1529 = vmatpush1.xpose.msra.mxu0 0.0
    %1530 = vmatprep.subr.mxu0 0.0
    %1531 = vmatpush1.xpose.msra.mxu0 0.0
    %1532 = vmatprep.subr.mxu0 0.0
    %1533 = vmatpush1.xpose.msra.mxu0 0.0
    %1534 = vmatprep.subr.mxu0 0.0
    %1535 = vmatpush1.xpose.msra.mxu0 0.0
    %1536 = vmatprep.subr.mxu0 0.0
    %1537 = vmatpush1.xpose.msra.mxu0 0.0
    %1538 = vmatprep.subr.mxu0 0.0
    %1539 = vmatpush1.xpose.msra.mxu0 0.0
    %1540 = vmatprep.subr.mxu0 0.0
    %1541 = vmatpush1.xpose.msra.mxu0 0.0
    %1542 = vmatprep.subr.mxu0 0.0
    %1543 = vmatpush1.xpose.msra.mxu0 0.0
    %1544 = vmatprep.subr.mxu0 0.0
    %1545 = vmatpush1.xpose.msra.mxu0 0.0
    %1546 = vmatprep.subr.mxu0 0.0
    %1547 = vmatpush1.xpose.msra.mxu0 0.0
    %1548 = vmatprep.subr.mxu0 0.0
    %1549 = vmatpush1.xpose.msra.mxu0 0.0
    %1550 = vmatprep.subr.mxu0 0.0
    %1551 = vmatpush1.xpose.msra.mxu0 0.0
    %1552 = vmatprep.subr.mxu0 0.0
    %1553 = vmatpush1.xpose.msra.mxu0 0.0
    %1554 = vmatprep.subr.mxu0 0.0
    %1555 = vmatpush1.xpose.msra.mxu0 0.0
    %1556 = vmatprep.subr.mxu0 0.0
    %1557 = vmatpush1.xpose.msra.mxu0 0.0
    %1558 = vmatprep.subr.mxu0 0.0
    %1559 = vmatpush1.xpose.msra.mxu0 0.0
    %1560 = vmatprep.subr.mxu0 0.0
    %1561 = vmatpush1.xpose.msra.mxu0 0.0
    %1562 = vmatprep.subr.mxu0 0.0
    %1563 = vmatpush1.xpose.msra.mxu0 0.0
    %1564 = vmatprep.subr.mxu0 0.0
    %1565 = vmatpush1.xpose.msra.mxu0 0.0
    %1566 = vmatprep.subr.mxu0 0.0
    %1567 = vmatpush1.xpose.msra.mxu0 0.0
    %1568 = vmatprep.subr.mxu0 0.0
    %1569 = vmatpush1.xpose.msra.mxu0 0.0
    %1570 = vmatprep.mubr.f32.mxu0 0.0
    %1571 = vmatmul.mubr.f32.gmra.mrb[0].mxu0 %v1495
    %v1572 = vpop.f32.mrb[0].mxu0
    %v1573 = vadd.f32 %v1491, %v1572
    %v1574 = vpop.f32.mrb[0].mxu0
    %1575 = vmatprep.mubr.f32.mxu0 0.0
    %1576 = vmatmul.mubr.f32.gmra.mrb[0].mxu0 %v1498
    %v1577 = vpop.f32.mrb[0].mxu0
    %v1578 = vadd.f32 %v1492, %v1577
    %v1579 = vpop.f32.mrb[0].mxu0
    %1580 = vdwg.mxu0
    %v1582 = vsel %vm1493, %v1381, 0
    %v1585 = vsel %vm1493, %v1382, 0
    %v1588 = vsel %vm1493, %v1485, 0
    %v1591 = vsel %vm1493, %v1486, 0
    %1593 = vmatprep.subr.mxu0 0.0
    %1594 = vmatpush1.xpose.msra.mxu0 %v1588
    %1595 = vmatprep.subr.mxu0 0.0
    %1596 = vmatpush1.xpose.msra.mxu0 %v1591
    %1597 = vmatprep.subr.mxu0 0.0
    %1598 = vmatpush1.xpose.msra.mxu0 0.0
    %1599 = vmatprep.subr.mxu0 0.0
    %1600 = vmatpush1.xpose.msra.mxu0 0.0
    %1601 = vmatprep.subr.mxu0 0.0
    %1602 = vmatpush1.xpose.msra.mxu0 0.0
    %1603 = vmatprep.subr.mxu0 0.0
    %1604 = vmatpush1.xpose.msra.mxu0 0.0
    %1605 = vmatprep.subr.mxu0 0.0
    %1606 = vmatpush1.xpose.msra.mxu0 0.0
    %1607 = vmatprep.subr.mxu0 0.0
    %1608 = vmatpush1.xpose.msra.mxu0 0.0
    %1609 = vmatprep.subr.mxu0 0.0
    %1610 = vmatpush1.xpose.msra.mxu0 0.0
    %1611 = vmatprep.subr.mxu0 0.0
    %1612 = vmatpush1.xpose.msra.mxu0 0.0
    %1613 = vmatprep.subr.mxu0 0.0
    %1614 = vmatpush1.xpose.msra.mxu0 0.0
    %1615 = vmatprep.subr.mxu0 0.0
    %1616 = vmatpush1.xpose.msra.mxu0 0.0
    %1617 = vmatprep.subr.mxu0 0.0
    %1618 = vmatpush1.xpose.msra.mxu0 0.0
    %1619 = vmatprep.subr.mxu0 0.0
    %1620 = vmatpush1.xpose.msra.mxu0 0.0
    %1621 = vmatprep.subr.mxu0 0.0
    %1622 = vmatpush1.xpose.msra.mxu0 0.0
    %1623 = vmatprep.subr.mxu0 0.0
    %1624 = vmatpush1.xpose.msra.mxu0 0.0
    %1625 = vmatprep.subr.mxu0 0.0
    %1626 = vmatpush1.xpose.msra.mxu0 0.0
    %1627 = vmatprep.subr.mxu0 0.0
    %1628 = vmatpush1.xpose.msra.mxu0 0.0
    %1629 = vmatprep.subr.mxu0 0.0
    %1630 = vmatpush1.xpose.msra.mxu0 0.0
    %1631 = vmatprep.subr.mxu0 0.0
    %1632 = vmatpush1.xpose.msra.mxu0 0.0
    %1633 = vmatprep.subr.mxu0 0.0
    %1634 = vmatpush1.xpose.msra.mxu0 0.0
    %1635 = vmatprep.subr.mxu0 0.0
    %1636 = vmatpush1.xpose.msra.mxu0 0.0
    %1637 = vmatprep.subr.mxu0 0.0
    %1638 = vmatpush1.xpose.msra.mxu0 0.0
    %1639 = vmatprep.subr.mxu0 0.0
    %1640 = vmatpush1.xpose.msra.mxu0 0.0
    %1641 = vmatprep.subr.mxu0 0.0
    %1642 = vmatpush1.xpose.msra.mxu0 0.0
    %1643 = vmatprep.subr.mxu0 0.0
    %1644 = vmatpush1.xpose.msra.mxu0 0.0
    %1645 = vmatprep.subr.mxu0 0.0
    %1646 = vmatpush1.xpose.msra.mxu0 0.0
    %1647 = vmatprep.subr.mxu0 0.0
    %1648 = vmatpush1.xpose.msra.mxu0 0.0
    %1649 = vmatprep.subr.mxu0 0.0
    %1650 = vmatpush1.xpose.msra.mxu0 0.0
    %1651 = vmatprep.subr.mxu0 0.0
    %1652 = vmatpush1.xpose.msra.mxu0 0.0
    %1653 = vmatprep.subr.mxu0 0.0
    %1654 = vmatpush1.xpose.msra.mxu0 0.0
    %1655 = vmatprep.subr.mxu0 0.0
    %1656 = vmatpush1.xpose.msra.mxu0 0.0
    %1657 = vmatprep.mubr.f32.mxu0 0.0
    %1658 = vmatmul.mubr.f32.gmra.mrb[0].mxu0 %v1582
    %v1659 = vpop.f32.mrb[0].mxu0
    %v1660 = vadd.f32 %v1491, %v1659
    %v1661 = vpop.f32.mrb[0].mxu0
    %1662 = vmatprep.mubr.f32.mxu0 0.0
    %1663 = vmatmul.mubr.f32.gmra.mrb[0].mxu0 %v1585
    %v1664 = vpop.f32.mrb[0].mxu0
    %v1665 = vadd.f32 %v1492, %v1664
    %v1666 = vpop.f32.mrb[0].mxu0
    %1667 = vdwg.mxu0
    %v1669 = vsel %vm1493, %v1383, 0
    %v1672 = vsel %vm1493, %v1384, 0
    %v1675 = vsel %vm1493, %v1487, 0
    %v1678 = vsel %vm1493, %v1488, 0
    %1680 = vmatprep.subr.mxu0 0.0
    %1681 = vmatpush1.xpose.msra.mxu0 %v1675
    %1682 = vmatprep.subr.mxu0 0.0
    %1683 = vmatpush1.xpose.msra.mxu0 %v1678
    %1684 = vmatprep.subr.mxu0 0.0
    %1685 = vmatpush1.xpose.msra.mxu0 0.0
    %1686 = vmatprep.subr.mxu0 0.0
    %1687 = vmatpush1.xpose.msra.mxu0 0.0
    %1688 = vmatprep.subr.mxu0 0.0
    %1689 = vmatpush1.xpose.msra.mxu0 0.0
    %1690 = vmatprep.subr.mxu0 0.0
    %1691 = vmatpush1.xpose.msra.mxu0 0.0
    %1692 = vmatprep.subr.mxu0 0.0
    %1693 = vmatpush1.xpose.msra.mxu0 0.0
    %1694 = vmatprep.subr.mxu0 0.0
    %1695 = vmatpush1.xpose.msra.mxu0 0.0
    %1696 = vmatprep.subr.mxu0 0.0
    %1697 = vmatpush1.xpose.msra.mxu0 0.0
    %1698 = vmatprep.subr.mxu0 0.0
    %1699 = vmatpush1.xpose.msra.mxu0 0.0
    %1700 = vmatprep.subr.mxu0 0.0
    %1701 = vmatpush1.xpose.msra.mxu0 0.0
    %1702 = vmatprep.subr.mxu0 0.0
    %1703 = vmatpush1.xpose.msra.mxu0 0.0
    %1704 = vmatprep.subr.mxu0 0.0
    %1705 = vmatpush1.xpose.msra.mxu0 0.0
    %1706 = vmatprep.subr.mxu0 0.0
    %1707 = vmatpush1.xpose.msra.mxu0 0.0
    %1708 = vmatprep.subr.mxu0 0.0
    %1709 = vmatpush1.xpose.msra.mxu0 0.0
    %1710 = vmatprep.subr.mxu0 0.0
    %1711 = vmatpush1.xpose.msra.mxu0 0.0
    %1712 = vmatprep.subr.mxu0 0.0
    %1713 = vmatpush1.xpose.msra.mxu0 0.0
    %1714 = vmatprep.subr.mxu0 0.0
    %1715 = vmatpush1.xpose.msra.mxu0 0.0
    %1716 = vmatprep.subr.mxu0 0.0
    %1717 = vmatpush1.xpose.msra.mxu0 0.0
    %1718 = vmatprep.subr.mxu0 0.0
    %1719 = vmatpush1.xpose.msra.mxu0 0.0
    %1720 = vmatprep.subr.mxu0 0.0
    %1721 = vmatpush1.xpose.msra.mxu0 0.0
    %1722 = vmatprep.subr.mxu0 0.0
    %1723 = vmatpush1.xpose.msra.mxu0 0.0
    %1724 = vmatprep.subr.mxu0 0.0
    %1725 = vmatpush1.xpose.msra.mxu0 0.0
    %1726 = vmatprep.subr.mxu0 0.0
    %1727 = vmatpush1.xpose.msra.mxu0 0.0
    %1728 = vmatprep.subr.mxu0 0.0
    %1729 = vmatpush1.xpose.msra.mxu0 0.0
    %1730 = vmatprep.subr.mxu0 0.0
    %1731 = vmatpush1.xpose.msra.mxu0 0.0
    %1732 = vmatprep.subr.mxu0 0.0
    %1733 = vmatpush1.xpose.msra.mxu0 0.0
    %1734 = vmatprep.subr.mxu0 0.0
    %1735 = vmatpush1.xpose.msra.mxu0 0.0
    %1736 = vmatprep.subr.mxu0 0.0
    %1737 = vmatpush1.xpose.msra.mxu0 0.0
    %1738 = vmatprep.subr.mxu0 0.0
    %1739 = vmatpush1.xpose.msra.mxu0 0.0
    %1740 = vmatprep.subr.mxu0 0.0
    %1741 = vmatpush1.xpose.msra.mxu0 0.0
    %1742 = vmatprep.subr.mxu0 0.0
    %1743 = vmatpush1.xpose.msra.mxu0 0.0
    %1744 = vmatprep.mubr.f32.mxu0 0.0
    %1745 = vmatmul.mubr.f32.gmra.mrb[0].mxu0 %v1669
    %v1746 = vpop.f32.mrb[0].mxu0
    %v1747 = vadd.f32 %v1491, %v1746
    %v1748 = vpop.f32.mrb[0].mxu0
    %1749 = vmatprep.mubr.f32.mxu0 0.0
    %1750 = vmatmul.mubr.f32.gmra.mrb[0].mxu0 %v1672
    %v1751 = vpop.f32.mrb[0].mxu0
    %v1752 = vadd.f32 %v1492, %v1751
    %v1753 = vpop.f32.mrb[0].mxu0
    %1754 = vdwg.mxu0
    %v1756 = vsel %vm1493, %v1385, 0
    %v1759 = vsel %vm1493, %v1386, 0
    %v1762 = vsel %vm1493, %v1489, 0
    %v1765 = vsel %vm1493, %v1490, 0
    %1767 = vmatprep.subr.mxu0 0.0
    %1768 = vmatpush1.xpose.msra.mxu0 %v1762
    %1769 = vmatprep.subr.mxu0 0.0
    %1770 = vmatpush1.xpose.msra.mxu0 %v1765
    %1771 = vmatprep.subr.mxu0 0.0
    %1772 = vmatpush1.xpose.msra.mxu0 0.0
    %1773 = vmatprep.subr.mxu0 0.0
    %1774 = vmatpush1.xpose.msra.mxu0 0.0
    %1775 = vmatprep.subr.mxu0 0.0
    %1776 = vmatpush1.xpose.msra.mxu0 0.0
    %1777 = vmatprep.subr.mxu0 0.0
    %1778 = vmatpush1.xpose.msra.mxu0 0.0
    %1779 = vmatprep.subr.mxu0 0.0
    %1780 = vmatpush1.xpose.msra.mxu0 0.0
    %1781 = vmatprep.subr.mxu0 0.0
    %1782 = vmatpush1.xpose.msra.mxu0 0.0
    %1783 = vmatprep.subr.mxu0 0.0
    %1784 = vmatpush1.xpose.msra.mxu0 0.0
    %1785 = vmatprep.subr.mxu0 0.0
    %1786 = vmatpush1.xpose.msra.mxu0 0.0
    %1787 = vmatprep.subr.mxu0 0.0
    %1788 = vmatpush1.xpose.msra.mxu0 0.0
    %1789 = vmatprep.subr.mxu0 0.0
    %1790 = vmatpush1.xpose.msra.mxu0 0.0
    %1791 = vmatprep.subr.mxu0 0.0
    %1792 = vmatpush1.xpose.msra.mxu0 0.0
    %1793 = vmatprep.subr.mxu0 0.0
    %1794 = vmatpush1.xpose.msra.mxu0 0.0
    %1795 = vmatprep.subr.mxu0 0.0
    %1796 = vmatpush1.xpose.msra.mxu0 0.0
    %1797 = vmatprep.subr.mxu0 0.0
    %1798 = vmatpush1.xpose.msra.mxu0 0.0
    %1799 = vmatprep.subr.mxu0 0.0
    %1800 = vmatpush1.xpose.msra.mxu0 0.0
    %1801 = vmatprep.subr.mxu0 0.0
    %1802 = vmatpush1.xpose.msra.mxu0 0.0
    %1803 = vmatprep.subr.mxu0 0.0
    %1804 = vmatpush1.xpose.msra.mxu0 0.0
    %1805 = vmatprep.subr.mxu0 0.0
    %1806 = vmatpush1.xpose.msra.mxu0 0.0
    %1807 = vmatprep.subr.mxu0 0.0
    %1808 = vmatpush1.xpose.msra.mxu0 0.0
    %1809 = vmatprep.subr.mxu0 0.0
    %1810 = vmatpush1.xpose.msra.mxu0 0.0
    %1811 = vmatprep.subr.mxu0 0.0
    %1812 = vmatpush1.xpose.msra.mxu0 0.0
    %1813 = vmatprep.subr.mxu0 0.0
    %1814 = vmatpush1.xpose.msra.mxu0 0.0
    %1815 = vmatprep.subr.mxu0 0.0
    %1816 = vmatpush1.xpose.msra.mxu0 0.0
    %1817 = vmatprep.subr.mxu0 0.0
    %1818 = vmatpush1.xpose.msra.mxu0 0.0
    %1819 = vmatprep.subr.mxu0 0.0
    %1820 = vmatpush1.xpose.msra.mxu0 0.0
    %1821 = vmatprep.subr.mxu0 0.0
    %1822 = vmatpush1.xpose.msra.mxu0 0.0
    %1823 = vmatprep.subr.mxu0 0.0
    %1824 = vmatpush1.xpose.msra.mxu0 0.0
    %1825 = vmatprep.subr.mxu0 0.0
    %1826 = vmatpush1.xpose.msra.mxu0 0.0
    %1827 = vmatprep.subr.mxu0 0.0
    %1828 = vmatpush1.xpose.msra.mxu0 0.0
    %1829 = vmatprep.subr.mxu0 0.0
    %1830 = vmatpush1.xpose.msra.mxu0 0.0
    %1831 = vmatprep.mubr.f32.mxu0 0.0
    %1832 = vmatmul.mubr.f32.gmra.mrb[0].mxu0 %v1756
    %v1833 = vpop.f32.mrb[0].mxu0
    %v1834 = vadd.f32 %v1491, %v1833
    %v1835 = vpop.f32.mrb[0].mxu0
    %1836 = vmatprep.mubr.f32.mxu0 0.0
    %1837 = vmatmul.mubr.f32.gmra.mrb[0].mxu0 %v1759
    %v1838 = vpop.f32.mrb[0].mxu0
    %v1839 = vadd.f32 %v1492, %v1838
    %v1840 = vpop.f32.mrb[0].mxu0
    %1841 = vdwg.mxu0
    %v1842 = vsel %vm1354, %v1573, -inf
    %1843 = vmax.xlane.f32.xlu0 %v1842
    %v1844 = vpop.xlane.xlu0 %1843
    %v1845 = vsel %vm1354, %v1578, -inf
    %1846 = vmax.xlane.f32.xlu0 %v1845
    %v1847 = vpop.xlane.xlu0 %1846
    %v1848 = vsel %vm1354, %v1660, -inf
    %1849 = vmax.xlane.f32.xlu0 %v1848
    %v1850 = vpop.xlane.xlu0 %1849
    %v1851 = vsel %vm1354, %v1665, -inf
    %1852 = vmax.xlane.f32.xlu0 %v1851
    %v1853 = vpop.xlane.xlu0 %1852
    %v1854 = vsel %vm1354, %v1747, -inf
    %1855 = vmax.xlane.f32.xlu0 %v1854
    %v1856 = vpop.xlane.xlu0 %1855
    %v1857 = vsel %vm1354, %v1752, -inf
    %1858 = vmax.xlane.f32.xlu0 %v1857
    %v1859 = vpop.xlane.xlu0 %1858
    %v1860 = vsel %vm1354, %v1834, -inf
    %1861 = vmax.xlane.f32.xlu0 %v1860
    %v1862 = vpop.xlane.xlu0 %1861
    %v1863 = vsel %vm1354, %v1839, -inf
    %1864 = vmax.xlane.f32.xlu0 %v1863
    %v1865 = vpop.xlane.xlu0 %1864
    %v1866 = vsub.f32 %v1573, %v1844
    %v1867 = vsub.f32 %v1578, %v1847
    %v1868 = vsub.f32 %v1660, %v1850
    %v1869 = vsub.f32 %v1665, %v1853
    %v1870 = vsub.f32 %v1747, %v1856
    %v1871 = vsub.f32 %v1752, %v1859
    %v1872 = vsub.f32 %v1834, %v1862
    %v1873 = vsub.f32 %v1839, %v1865
    %v1874 = vmul.f32 %v1866, 1.442695
    %v1875 = vpow.pop %v1874
    %v1876 = vmul.f32 %v1867, 1.442695
    %v1877 = vpow.pop %v1876
    %v1878 = vmul.f32 %v1868, 1.442695
    %v1879 = vpow.pop %v1878
    %v1880 = vmul.f32 %v1869, 1.442695
    %v1881 = vpow.pop %v1880
    %v1882 = vmul.f32 %v1870, 1.442695
    %v1883 = vpow.pop %v1882
    %v1884 = vmul.f32 %v1871, 1.442695
    %v1885 = vpow.pop %v1884
    %v1886 = vmul.f32 %v1872, 1.442695
    %v1887 = vpow.pop %v1886
    %v1888 = vmul.f32 %v1873, 1.442695
    %v1889 = vpow.pop %v1888
    %v1890 = vsel %vm1354, %v1875, 0.0
    %1891 = vadd.xlane.f32.xlu0 %v1890
    %v1892 = vpop.xlane.xlu0 %1891
    %v1893 = vsel %vm1354, %v1877, 0.0
    %1894 = vadd.xlane.f32.xlu0 %v1893
    %v1895 = vpop.xlane.xlu0 %1894
    %v1896 = vsel %vm1354, %v1879, 0.0
    %1897 = vadd.xlane.f32.xlu0 %v1896
    %v1898 = vpop.xlane.xlu0 %1897
    %v1899 = vsel %vm1354, %v1881, 0.0
    %1900 = vadd.xlane.f32.xlu0 %v1899
    %v1901 = vpop.xlane.xlu0 %1900
    %v1902 = vsel %vm1354, %v1883, 0.0
    %1903 = vadd.xlane.f32.xlu0 %v1902
    %v1904 = vpop.xlane.xlu0 %1903
    %v1905 = vsel %vm1354, %v1885, 0.0
    %1906 = vadd.xlane.f32.xlu0 %v1905
    %v1907 = vpop.xlane.xlu0 %1906
    %v1908 = vsel %vm1354, %v1887, 0.0
    %1909 = vadd.xlane.f32.xlu0 %v1908
    %v1910 = vpop.xlane.xlu0 %1909
    %v1911 = vsel %vm1354, %v1889, 0.0
    %1912 = vadd.xlane.f32.xlu0 %v1911
    %v1913 = vpop.xlane.xlu0 %1912
    %v1914 = vrcp.pop %v1892
    %v1915 = vmul.f32 %v1875, %v1914
    %v1916 = vrcp.pop %v1895
    %v1917 = vmul.f32 %v1877, %v1916
    %v1918 = vrcp.pop %v1898
    %v1919 = vmul.f32 %v1879, %v1918
    %v1920 = vrcp.pop %v1901
    %v1921 = vmul.f32 %v1881, %v1920
    %v1922 = vrcp.pop %v1904
    %v1923 = vmul.f32 %v1883, %v1922
    %v1924 = vrcp.pop %v1907
    %v1925 = vmul.f32 %v1885, %v1924
    %v1926 = vrcp.pop %v1910
    %v1927 = vmul.f32 %v1887, %v1926
    %v1928 = vrcp.pop %v1913
    %v1929 = vmul.f32 %v1889, %v1928
    %v1931 = vsel %vm1354, %v1915, 0
    %v1934 = vsel %vm1354, %v1917, 0
    %1936 = vmatprep.subr.mxu0 0.0
    %1937 = vmatpush1.msra.mxu0 %v1206
    %1938 = vmatprep.subr.mxu0 0.0
    %1939 = vmatpush1.msra.mxu0 %v1274
    %1940 = vmatprep.subr.mxu0 0.0
    %1941 = vmatpush1.msra.mxu0 0.0
    %1942 = vmatprep.subr.mxu0 0.0
    %1943 = vmatpush1.msra.mxu0 0.0
    %1944 = vmatprep.subr.mxu0 0.0
    %1945 = vmatpush1.msra.mxu0 0.0
    %1946 = vmatprep.subr.mxu0 0.0
    %1947 = vmatpush1.msra.mxu0 0.0
    %1948 = vmatprep.subr.mxu0 0.0
    %1949 = vmatpush1.msra.mxu0 0.0
    %1950 = vmatprep.subr.mxu0 0.0
    %1951 = vmatpush1.msra.mxu0 0.0
    %1952 = vmatprep.subr.mxu0 0.0
    %1953 = vmatpush1.msra.mxu0 0.0
    %1954 = vmatprep.subr.mxu0 0.0
    %1955 = vmatpush1.msra.mxu0 0.0
    %1956 = vmatprep.subr.mxu0 0.0
    %1957 = vmatpush1.msra.mxu0 0.0
    %1958 = vmatprep.subr.mxu0 0.0
    %1959 = vmatpush1.msra.mxu0 0.0
    %1960 = vmatprep.subr.mxu0 0.0
    %1961 = vmatpush1.msra.mxu0 0.0
    %1962 = vmatprep.subr.mxu0 0.0
    %1963 = vmatpush1.msra.mxu0 0.0
    %1964 = vmatprep.subr.mxu0 0.0
    %1965 = vmatpush1.msra.mxu0 0.0
    %1966 = vmatprep.subr.mxu0 0.0
    %1967 = vmatpush1.msra.mxu0 0.0
    %1968 = vmatprep.subr.mxu0 0.0
    %1969 = vmatpush1.msra.mxu0 0.0
    %1970 = vmatprep.subr.mxu0 0.0
    %1971 = vmatpush1.msra.mxu0 0.0
    %1972 = vmatprep.subr.mxu0 0.0
    %1973 = vmatpush1.msra.mxu0 0.0
    %1974 = vmatprep.subr.mxu0 0.0
    %1975 = vmatpush1.msra.mxu0 0.0
    %1976 = vmatprep.subr.mxu0 0.0
    %1977 = vmatpush1.msra.mxu0 0.0
    %1978 = vmatprep.subr.mxu0 0.0
    %1979 = vmatpush1.msra.mxu0 0.0
    %1980 = vmatprep.subr.mxu0 0.0
    %1981 = vmatpush1.msra.mxu0 0.0
    %1982 = vmatprep.subr.mxu0 0.0
    %1983 = vmatpush1.msra.mxu0 0.0
    %1984 = vmatprep.subr.mxu0 0.0
    %1985 = vmatpush1.msra.mxu0 0.0
    %1986 = vmatprep.subr.mxu0 0.0
    %1987 = vmatpush1.msra.mxu0 0.0
    %1988 = vmatprep.subr.mxu0 0.0
    %1989 = vmatpush1.msra.mxu0 0.0
    %1990 = vmatprep.subr.mxu0 0.0
    %1991 = vmatpush1.msra.mxu0 0.0
    %1992 = vmatprep.subr.mxu0 0.0
    %1993 = vmatpush1.msra.mxu0 0.0
    %1994 = vmatprep.subr.mxu0 0.0
    %1995 = vmatpush1.msra.mxu0 0.0
    %1996 = vmatprep.subr.mxu0 0.0
    %1997 = vmatpush1.msra.mxu0 0.0
    %1998 = vmatprep.subr.mxu0 0.0
    %1999 = vmatpush1.msra.mxu0 0.0
    %2000 = vmatprep.mubr.f32.mxu0 0.0
    %2001 = vmatmul.mubr.f32.gmra.mrb[0].mxu0 %v1931
    %v2002 = vpop.f32.mrb[0].mxu0
    %v2003 = vadd.f32 0.0, %v2002
    %v2004 = vpop.f32.mrb[0].mxu0
    %2005 = vmatprep.mubr.f32.mxu0 0.0
    %2006 = vmatmul.mubr.f32.gmra.mrb[0].mxu0 %v1934
    %v2007 = vpop.f32.mrb[0].mxu0
    %v2008 = vadd.f32 0.0, %v2007
    %v2009 = vpop.f32.mrb[0].mxu0
    %2010 = vdwg.mxu0
    %v2012 = vsel %vm1354, %v1919, 0
    %v2015 = vsel %vm1354, %v1921, 0
    %2017 = vmatprep.subr.mxu0 0.0
    %2018 = vmatpush1.msra.mxu0 %v1207
    %2019 = vmatprep.subr.mxu0 0.0
    %2020 = vmatpush1.msra.mxu0 %v1275
    %2021 = vmatprep.subr.mxu0 0.0
    %2022 = vmatpush1.msra.mxu0 0.0
    %2023 = vmatprep.subr.mxu0 0.0
    %2024 = vmatpush1.msra.mxu0 0.0
    %2025 = vmatprep.subr.mxu0 0.0
    %2026 = vmatpush1.msra.mxu0 0.0
    %2027 = vmatprep.subr.mxu0 0.0
    %2028 = vmatpush1.msra.mxu0 0.0
    %2029 = vmatprep.subr.mxu0 0.0
    %2030 = vmatpush1.msra.mxu0 0.0
    %2031 = vmatprep.subr.mxu0 0.0
    %2032 = vmatpush1.msra.mxu0 0.0
    %2033 = vmatprep.subr.mxu0 0.0
    %2034 = vmatpush1.msra.mxu0 0.0
    %2035 = vmatprep.subr.mxu0 0.0
    %2036 = vmatpush1.msra.mxu0 0.0
    %2037 = vmatprep.subr.mxu0 0.0
    %2038 = vmatpush1.msra.mxu0 0.0
    %2039 = vmatprep.subr.mxu0 0.0
    %2040 = vmatpush1.msra.mxu0 0.0
    %2041 = vmatprep.subr.mxu0 0.0
    %2042 = vmatpush1.msra.mxu0 0.0
    %2043 = vmatprep.subr.mxu0 0.0
    %2044 = vmatpush1.msra.mxu0 0.0
    %2045 = vmatprep.subr.mxu0 0.0
    %2046 = vmatpush1.msra.mxu0 0.0
    %2047 = vmatprep.subr.mxu0 0.0
    %2048 = vmatpush1.msra.mxu0 0.0
    %2049 = vmatprep.subr.mxu0 0.0
    %2050 = vmatpush1.msra.mxu0 0.0
    %2051 = vmatprep.subr.mxu0 0.0
    %2052 = vmatpush1.msra.mxu0 0.0
    %2053 = vmatprep.subr.mxu0 0.0
    %2054 = vmatpush1.msra.mxu0 0.0
    %2055 = vmatprep.subr.mxu0 0.0
    %2056 = vmatpush1.msra.mxu0 0.0
    %2057 = vmatprep.subr.mxu0 0.0
    %2058 = vmatpush1.msra.mxu0 0.0
    %2059 = vmatprep.subr.mxu0 0.0
    %2060 = vmatpush1.msra.mxu0 0.0
    %2061 = vmatprep.subr.mxu0 0.0
    %2062 = vmatpush1.msra.mxu0 0.0
    %2063 = vmatprep.subr.mxu0 0.0
    %2064 = vmatpush1.msra.mxu0 0.0
    %2065 = vmatprep.subr.mxu0 0.0
    %2066 = vmatpush1.msra.mxu0 0.0
    %2067 = vmatprep.subr.mxu0 0.0
    %2068 = vmatpush1.msra.mxu0 0.0
    %2069 = vmatprep.subr.mxu0 0.0
    %2070 = vmatpush1.msra.mxu0 0.0
    %2071 = vmatprep.subr.mxu0 0.0
    %2072 = vmatpush1.msra.mxu0 0.0
    %2073 = vmatprep.subr.mxu0 0.0
    %2074 = vmatpush1.msra.mxu0 0.0
    %2075 = vmatprep.subr.mxu0 0.0
    %2076 = vmatpush1.msra.mxu0 0.0
    %2077 = vmatprep.subr.mxu0 0.0
    %2078 = vmatpush1.msra.mxu0 0.0
    %2079 = vmatprep.subr.mxu0 0.0
    %2080 = vmatpush1.msra.mxu0 0.0
    %2081 = vmatprep.mubr.f32.mxu0 0.0
    %2082 = vmatmul.mubr.f32.gmra.mrb[0].mxu0 %v2012
    %v2083 = vpop.f32.mrb[0].mxu0
    %v2084 = vadd.f32 0.0, %v2083
    %v2085 = vpop.f32.mrb[0].mxu0
    %2086 = vmatprep.mubr.f32.mxu0 0.0
    %2087 = vmatmul.mubr.f32.gmra.mrb[0].mxu0 %v2015
    %v2088 = vpop.f32.mrb[0].mxu0
    %v2089 = vadd.f32 0.0, %v2088
    %v2090 = vpop.f32.mrb[0].mxu0
    %2091 = vdwg.mxu0
    %v2093 = vsel %vm1354, %v1923, 0
    %v2096 = vsel %vm1354, %v1925, 0
    %2098 = vmatprep.subr.mxu0 0.0
    %2099 = vmatpush1.msra.mxu0 %v1208
    %2100 = vmatprep.subr.mxu0 0.0
    %2101 = vmatpush1.msra.mxu0 %v1276
    %2102 = vmatprep.subr.mxu0 0.0
    %2103 = vmatpush1.msra.mxu0 0.0
    %2104 = vmatprep.subr.mxu0 0.0
    %2105 = vmatpush1.msra.mxu0 0.0
    %2106 = vmatprep.subr.mxu0 0.0
    %2107 = vmatpush1.msra.mxu0 0.0
    %2108 = vmatprep.subr.mxu0 0.0
    %2109 = vmatpush1.msra.mxu0 0.0
    %2110 = vmatprep.subr.mxu0 0.0
    %2111 = vmatpush1.msra.mxu0 0.0
    %2112 = vmatprep.subr.mxu0 0.0
    %2113 = vmatpush1.msra.mxu0 0.0
    %2114 = vmatprep.subr.mxu0 0.0
    %2115 = vmatpush1.msra.mxu0 0.0
    %2116 = vmatprep.subr.mxu0 0.0
    %2117 = vmatpush1.msra.mxu0 0.0
    %2118 = vmatprep.subr.mxu0 0.0
    %2119 = vmatpush1.msra.mxu0 0.0
    %2120 = vmatprep.subr.mxu0 0.0
    %2121 = vmatpush1.msra.mxu0 0.0
    %2122 = vmatprep.subr.mxu0 0.0
    %2123 = vmatpush1.msra.mxu0 0.0
    %2124 = vmatprep.subr.mxu0 0.0
    %2125 = vmatpush1.msra.mxu0 0.0
    %2126 = vmatprep.subr.mxu0 0.0
    %2127 = vmatpush1.msra.mxu0 0.0
    %2128 = vmatprep.subr.mxu0 0.0
    %2129 = vmatpush1.msra.mxu0 0.0
    %2130 = vmatprep.subr.mxu0 0.0
    %2131 = vmatpush1.msra.mxu0 0.0
    %2132 = vmatprep.subr.mxu0 0.0
    %2133 = vmatpush1.msra.mxu0 0.0
    %2134 = vmatprep.subr.mxu0 0.0
    %2135 = vmatpush1.msra.mxu0 0.0
    %2136 = vmatprep.subr.mxu0 0.0
    %2137 = vmatpush1.msra.mxu0 0.0
    %2138 = vmatprep.subr.mxu0 0.0
    %2139 = vmatpush1.msra.mxu0 0.0
    %2140 = vmatprep.subr.mxu0 0.0
    %2141 = vmatpush1.msra.mxu0 0.0
    %2142 = vmatprep.subr.mxu0 0.0
    %2143 = vmatpush1.msra.mxu0 0.0
    %2144 = vmatprep.subr.mxu0 0.0
    %2145 = vmatpush1.msra.mxu0 0.0
    %2146 = vmatprep.subr.mxu0 0.0
    %2147 = vmatpush1.msra.mxu0 0.0
    %2148 = vmatprep.subr.mxu0 0.0
    %2149 = vmatpush1.msra.mxu0 0.0
    %2150 = vmatprep.subr.mxu0 0.0
    %2151 = vmatpush1.msra.mxu0 0.0
    %2152 = vmatprep.subr.mxu0 0.0
    %2153 = vmatpush1.msra.mxu0 0.0
    %2154 = vmatprep.subr.mxu0 0.0
    %2155 = vmatpush1.msra.mxu0 0.0
    %2156 = vmatprep.subr.mxu0 0.0
    %2157 = vmatpush1.msra.mxu0 0.0
    %2158 = vmatprep.subr.mxu0 0.0
    %2159 = vmatpush1.msra.mxu0 0.0
    %2160 = vmatprep.subr.mxu0 0.0
    %2161 = vmatpush1.msra.mxu0 0.0
    %2162 = vmatprep.mubr.f32.mxu0 0.0
    %2163 = vmatmul.mubr.f32.gmra.mrb[0].mxu0 %v2093
    %v2164 = vpop.f32.mrb[0].mxu0
    %v2165 = vadd.f32 0.0, %v2164
    %v2166 = vpop.f32.mrb[0].mxu0
    %2167 = vmatprep.mubr.f32.mxu0 0.0
    %2168 = vmatmul.mubr.f32.gmra.mrb[0].mxu0 %v2096
    %v2169 = vpop.f32.mrb[0].mxu0
    %v2170 = vadd.f32 0.0, %v2169
    %v2171 = vpop.f32.mrb[0].mxu0
    %2172 = vdwg.mxu0
    %v2174 = vsel %vm1354, %v1927, 0
    %v2177 = vsel %vm1354, %v1929, 0
    %2179 = vmatprep.subr.mxu0 0.0
    %2180 = vmatpush1.msra.mxu0 %v1209
    %2181 = vmatprep.subr.mxu0 0.0
    %2182 = vmatpush1.msra.mxu0 %v1277
    %2183 = vmatprep.subr.mxu0 0.0
    %2184 = vmatpush1.msra.mxu0 0.0
    %2185 = vmatprep.subr.mxu0 0.0
    %2186 = vmatpush1.msra.mxu0 0.0
    %2187 = vmatprep.subr.mxu0 0.0
    %2188 = vmatpush1.msra.mxu0 0.0
    %2189 = vmatprep.subr.mxu0 0.0
    %2190 = vmatpush1.msra.mxu0 0.0
    %2191 = vmatprep.subr.mxu0 0.0
    %2192 = vmatpush1.msra.mxu0 0.0
    %2193 = vmatprep.subr.mxu0 0.0
    %2194 = vmatpush1.msra.mxu0 0.0
    %2195 = vmatprep.subr.mxu0 0.0
    %2196 = vmatpush1.msra.mxu0 0.0
    %2197 = vmatprep.subr.mxu0 0.0
    %2198 = vmatpush1.msra.mxu0 0.0
    %2199 = vmatprep.subr.mxu0 0.0
    %2200 = vmatpush1.msra.mxu0 0.0
    %2201 = vmatprep.subr.mxu0 0.0
    %2202 = vmatpush1.msra.mxu0 0.0
    %2203 = vmatprep.subr.mxu0 0.0
    %2204 = vmatpush1.msra.mxu0 0.0
    %2205 = vmatprep.subr.mxu0 0.0
    %2206 = vmatpush1.msra.mxu0 0.0
    %2207 = vmatprep.subr.mxu0 0.0
    %2208 = vmatpush1.msra.mxu0 0.0
    %2209 = vmatprep.subr.mxu0 0.0
    %2210 = vmatpush1.msra.mxu0 0.0
    %2211 = vmatprep.subr.mxu0 0.0
    %2212 = vmatpush1.msra.mxu0 0.0
    %2213 = vmatprep.subr.mxu0 0.0
    %2214 = vmatpush1.msra.mxu0 0.0
    %2215 = vmatprep.subr.mxu0 0.0
    %2216 = vmatpush1.msra.mxu0 0.0
    %2217 = vmatprep.subr.mxu0 0.0
    %2218 = vmatpush1.msra.mxu0 0.0
    %2219 = vmatprep.subr.mxu0 0.0
    %2220 = vmatpush1.msra.mxu0 0.0
    %2221 = vmatprep.subr.mxu0 0.0
    %2222 = vmatpush1.msra.mxu0 0.0
    %2223 = vmatprep.subr.mxu0 0.0
    %2224 = vmatpush1.msra.mxu0 0.0
    %2225 = vmatprep.subr.mxu0 0.0
    %2226 = vmatpush1.msra.mxu0 0.0
    %2227 = vmatprep.subr.mxu0 0.0
    %2228 = vmatpush1.msra.mxu0 0.0
    %2229 = vmatprep.subr.mxu0 0.0
    %2230 = vmatpush1.msra.mxu0 0.0
    %2231 = vmatprep.subr.mxu0 0.0
    %2232 = vmatpush1.msra.mxu0 0.0
    %2233 = vmatprep.subr.mxu0 0.0
    %2234 = vmatpush1.msra.mxu0 0.0
    %2235 = vmatprep.subr.mxu0 0.0
    %2236 = vmatpush1.msra.mxu0 0.0
    %2237 = vmatprep.subr.mxu0 0.0
    %2238 = vmatpush1.msra.mxu0 0.0
    %2239 = vmatprep.subr.mxu0 0.0
    %2240 = vmatpush1.msra.mxu0 0.0
    %2241 = vmatprep.subr.mxu0 0.0
    %2242 = vmatpush1.msra.mxu0 0.0
    %2243 = vmatprep.mubr.f32.mxu0 0.0
    %2244 = vmatmul.mubr.f32.gmra.mrb[0].mxu0 %v2174
    %v2245 = vpop.f32.mrb[0].mxu0
    %v2246 = vadd.f32 0.0, %v2245
    %v2247 = vpop.f32.mrb[0].mxu0
    %2248 = vmatprep.mubr.f32.mxu0 0.0
    %2249 = vmatmul.mubr.f32.gmra.mrb[0].mxu0 %v2177
    %v2250 = vpop.f32.mrb[0].mxu0
    %v2251 = vadd.f32 0.0, %v2250
    %v2252 = vpop.f32.mrb[0].mxu0
    %2253 = vdwg.mxu0
    %v2254 = vcombine.low %v2003, %v2165
    %v2255 = vcombine.high %v2003, %v2165
    %v2257 = vunpack.c.l.s4 1983009808
    %v2258 = vunpack.c.0.s8 %v2257
    %v2259 = vlaneseq
    %v2260 = vshrl.u32 %v2259, 7
    %v2261 = vsub.s32 %v2258, %v2260
    %v2262 = vrot.slane %v2254, %v2261
    %v2264 = vunpack.c.l.s4 1983009808
    %v2265 = vunpack.c.0.s8 %v2264
    %v2266 = vlaneseq
    %v2267 = vshrl.u32 %v2266, 7
    %v2268 = vsub.s32 %v2265, %v2267
    %v2269 = vrot.slane %v2255, %v2268
    %v2270 = vcombine.low %v2084, %v2246
    %v2271 = vcombine.high %v2084, %v2246
    %v2273 = vunpack.c.l.s4 1983009808
    %v2274 = vunpack.c.0.s8 %v2273
    %v2275 = vlaneseq
    %v2276 = vshrl.u32 %v2275, 7
    %v2277 = vsub.s32 %v2274, %v2276
    %v2278 = vrot.slane %v2270, %v2277
    %v2280 = vunpack.c.l.s4 1983009808
    %v2281 = vunpack.c.0.s8 %v2280
    %v2282 = vlaneseq
    %v2283 = vshrl.u32 %v2282, 7
    %v2284 = vsub.s32 %v2281, %v2283
    %v2285 = vrot.slane %v2271, %v2284
    %v2286 = vcombine.low %v2262, %v2278
    %v2287 = vcombine.high %v2262, %v2278
    %v2289 = vunpack.c.l.s4 1934713408
    %v2290 = vunpack.c.0.s8 %v2289
    %v2291 = vlaneseq
    %v2292 = vshrl.u32 %v2291, 7
    %v2293 = vsub.s32 %v2290, %v2292
    %v2294 = vrot.slane %v2286, %v2293
    %v2296 = vunpack.c.l.s4 1934713408
    %v2297 = vunpack.c.0.s8 %v2296
    %v2298 = vlaneseq
    %v2299 = vshrl.u32 %v2298, 7
    %v2300 = vsub.s32 %v2297, %v2299
    %v2301 = vrot.slane %v2287, %v2300
    %v2302 = vcombine.low %v2269, %v2285
    %v2303 = vcombine.high %v2269, %v2285
    %v2305 = vunpack.c.l.s4 1934713408
    %v2306 = vunpack.c.0.s8 %v2305
    %v2307 = vlaneseq
    %v2308 = vshrl.u32 %v2307, 7
    %v2309 = vsub.s32 %v2306, %v2308
    %v2310 = vrot.slane %v2302, %v2309
    %v2312 = vunpack.c.l.s4 1934713408
    %v2313 = vunpack.c.0.s8 %v2312
    %v2314 = vlaneseq
    %v2315 = vshrl.u32 %v2314, 7
    %v2316 = vsub.s32 %v2313, %v2315
    %v2317 = vrot.slane %v2303, %v2316
    %v2318 = vcombine.high %v2294, 0.0
    %v2319 = vcombine.high %v2301, 0.0
    %v2320 = vcombine.high %v2310, 0.0
    %v2321 = vcombine.high %v2317, 0.0
    %v2322 = vcombine.low %v2008, %v2170
    %v2323 = vcombine.high %v2008, %v2170
    %v2325 = vunpack.c.l.s4 1983009808
    %v2326 = vunpack.c.0.s8 %v2325
    %v2327 = vlaneseq
    %v2328 = vshrl.u32 %v2327, 7
    %v2329 = vsub.s32 %v2326, %v2328
    %v2330 = vrot.slane %v2322, %v2329
    %v2332 = vunpack.c.l.s4 1983009808
    %v2333 = vunpack.c.0.s8 %v2332
    %v2334 = vlaneseq
    %v2335 = vshrl.u32 %v2334, 7
    %v2336 = vsub.s32 %v2333, %v2335
    %v2337 = vrot.slane %v2323, %v2336
    %v2338 = vcombine.low %v2089, %v2251
    %v2339 = vcombine.high %v2089, %v2251
    %v2341 = vunpack.c.l.s4 1983009808
    %v2342 = vunpack.c.0.s8 %v2341
    %v2343 = vlaneseq
    %v2344 = vshrl.u32 %v2343, 7
    %v2345 = vsub.s32 %v2342, %v2344
    %v2346 = vrot.slane %v2338, %v2345
    %v2348 = vunpack.c.l.s4 1983009808
    %v2349 = vunpack.c.0.s8 %v2348
    %v2350 = vlaneseq
    %v2351 = vshrl.u32 %v2350, 7
    %v2352 = vsub.s32 %v2349, %v2351
    %v2353 = vrot.slane %v2339, %v2352
    %v2354 = vcombine.low %v2330, %v2346
    %v2355 = vcombine.high %v2330, %v2346
    %v2357 = vunpack.c.l.s4 1934713408
    %v2358 = vunpack.c.0.s8 %v2357
    %v2359 = vlaneseq
    %v2360 = vshrl.u32 %v2359, 7
    %v2361 = vsub.s32 %v2358, %v2360
    %v2362 = vrot.slane %v2354, %v2361
    %v2364 = vunpack.c.l.s4 1934713408
    %v2365 = vunpack.c.0.s8 %v2364
    %v2366 = vlaneseq
    %v2367 = vshrl.u32 %v2366, 7
    %v2368 = vsub.s32 %v2365, %v2367
    %v2369 = vrot.slane %v2355, %v2368
    %v2370 = vcombine.low %v2337, %v2353
    %v2371 = vcombine.high %v2337, %v2353
    %v2373 = vunpack.c.l.s4 1934713408
    %v2374 = vunpack.c.0.s8 %v2373
    %v2375 = vlaneseq
    %v2376 = vshrl.u32 %v2375, 7
    %v2377 = vsub.s32 %v2374, %v2376
    %v2378 = vrot.slane %v2370, %v2377
    %v2380 = vunpack.c.l.s4 1934713408
    %v2381 = vunpack.c.0.s8 %v2380
    %v2382 = vlaneseq
    %v2383 = vshrl.u32 %v2382, 7
    %v2384 = vsub.s32 %v2381, %v2383
    %v2385 = vrot.slane %v2371, %v2384
    %v2386 = vcombine.high %v2362, 0.0
    %v2387 = vcombine.high %v2369, 0.0
    %v2388 = vcombine.high %v2378, 0.0
    %v2389 = vcombine.high %v2385, 0.0
    %v2390 = vcombine.low %v2294, %v2301
    %v2392 = vunpack.c.l.s4 1983009808
    %v2393 = vunpack.c.0.s8 %v2392
    %v2394 = vlaneseq
    %v2395 = vshrl.u32 %v2394, 7
    %v2396 = vsub.s32 %v2393, %v2395
    %v2397 = vrot.slane %v2390, %v2396
    %v2398 = vcombine.low %v2318, %v2319
    %v2400 = vunpack.c.l.s4 1983009808
    %v2401 = vunpack.c.0.s8 %v2400
    %v2402 = vlaneseq
    %v2403 = vshrl.u32 %v2402, 7
    %v2404 = vsub.s32 %v2401, %v2403
    %v2405 = vrot.slane %v2398, %v2404
    %v2406 = vcombine.low %v2310, %v2317
    %v2408 = vunpack.c.l.s4 1983009808
    %v2409 = vunpack.c.0.s8 %v2408
    %v2410 = vlaneseq
    %v2411 = vshrl.u32 %v2410, 7
    %v2412 = vsub.s32 %v2409, %v2411
    %v2413 = vrot.slane %v2406, %v2412
    %v2414 = vcombine.low %v2320, %v2321
    %v2416 = vunpack.c.l.s4 1983009808
    %v2417 = vunpack.c.0.s8 %v2416
    %v2418 = vlaneseq
    %v2419 = vshrl.u32 %v2418, 7
    %v2420 = vsub.s32 %v2417, %v2419
    %v2421 = vrot.slane %v2414, %v2420
    %v2422 = vcombine.low %v2397, %v2405
    %v2423 = vcombine.high %v2397, %v2405
    %v2425 = vunpack.c.l.s4 1934713408
    %v2426 = vunpack.c.0.s8 %v2425
    %v2427 = vlaneseq
    %v2428 = vshrl.u32 %v2427, 7
    %v2429 = vsub.s32 %v2426, %v2428
    %v2430 = vrot.slane %v2422, %v2429
    %v2432 = vunpack.c.l.s4 1934713408
    %v2433 = vunpack.c.0.s8 %v2432
    %v2434 = vlaneseq
    %v2435 = vshrl.u32 %v2434, 7
    %v2436 = vsub.s32 %v2433, %v2435
    %v2437 = vrot.slane %v2423, %v2436
    %v2438 = vcombine.low %v2413, %v2421
    %v2439 = vcombine.high %v2413, %v2421
    %v2441 = vunpack.c.l.s4 1934713408
    %v2442 = vunpack.c.0.s8 %v2441
    %v2443 = vlaneseq
    %v2444 = vshrl.u32 %v2443, 7
    %v2445 = vsub.s32 %v2442, %v2444
    %v2446 = vrot.slane %v2438, %v2445
    %v2448 = vunpack.c.l.s4 1934713408
    %v2449 = vunpack.c.0.s8 %v2448
    %v2450 = vlaneseq
    %v2451 = vshrl.u32 %v2450, 7
    %v2452 = vsub.s32 %v2449, %v2451
    %v2453 = vrot.slane %v2439, %v2452
    %v2454 = vcombine.low %v2430, %v2446
    %v2455 = vcombine.high %v2430, %v2446
    %v2456 = vcombine.low %v2437, %v2453
    %v2457 = vcombine.high %v2437, %v2453
    %v2458 = vcombine.low %v2362, %v2369
    %v2460 = vunpack.c.l.s4 1983009808
    %v2461 = vunpack.c.0.s8 %v2460
    %v2462 = vlaneseq
    %v2463 = vshrl.u32 %v2462, 7
    %v2464 = vsub.s32 %v2461, %v2463
    %v2465 = vrot.slane %v2458, %v2464
    %v2466 = vcombine.low %v2386, %v2387
    %v2468 = vunpack.c.l.s4 1983009808
    %v2469 = vunpack.c.0.s8 %v2468
    %v2470 = vlaneseq
    %v2471 = vshrl.u32 %v2470, 7
    %v2472 = vsub.s32 %v2469, %v2471
    %v2473 = vrot.slane %v2466, %v2472
    %v2474 = vcombine.low %v2378, %v2385
    %v2476 = vunpack.c.l.s4 1983009808
    %v2477 = vunpack.c.0.s8 %v2476
    %v2478 = vlaneseq
    %v2479 = vshrl.u32 %v2478, 7
    %v2480 = vsub.s32 %v2477, %v2479
    %v2481 = vrot.slane %v2474, %v2480
    %v2482 = vcombine.low %v2388, %v2389
    %v2484 = vunpack.c.l.s4 1983009808
    %v2485 = vunpack.c.0.s8 %v2484
    %v2486 = vlaneseq
    %v2487 = vshrl.u32 %v2486, 7
    %v2488 = vsub.s32 %v2485, %v2487
    %v2489 = vrot.slane %v2482, %v2488
    %v2490 = vcombine.low %v2465, %v2473
    %v2491 = vcombine.high %v2465, %v2473
    %v2493 = vunpack.c.l.s4 1934713408
    %v2494 = vunpack.c.0.s8 %v2493
    %v2495 = vlaneseq
    %v2496 = vshrl.u32 %v2495, 7
    %v2497 = vsub.s32 %v2494, %v2496
    %v2498 = vrot.slane %v2490, %v2497
    %v2500 = vunpack.c.l.s4 1934713408
    %v2501 = vunpack.c.0.s8 %v2500
    %v2502 = vlaneseq
    %v2503 = vshrl.u32 %v2502, 7
    %v2504 = vsub.s32 %v2501, %v2503
    %v2505 = vrot.slane %v2491, %v2504
    %v2506 = vcombine.low %v2481, %v2489
    %v2507 = vcombine.high %v2481, %v2489
    %v2509 = vunpack.c.l.s4 1934713408
    %v2510 = vunpack.c.0.s8 %v2509
    %v2511 = vlaneseq
    %v2512 = vshrl.u32 %v2511, 7
    %v2513 = vsub.s32 %v2510, %v2512
    %v2514 = vrot.slane %v2506, %v2513
    %v2516 = vunpack.c.l.s4 1934713408
    %v2517 = vunpack.c.0.s8 %v2516
    %v2518 = vlaneseq
    %v2519 = vshrl.u32 %v2518, 7
    %v2520 = vsub.s32 %v2517, %v2519
    %v2521 = vrot.slane %v2507, %v2520
    %v2522 = vcombine.low %v2498, %v2514
    %v2523 = vcombine.high %v2498, %v2514
    %v2524 = vcombine.low %v2505, %v2521
    %v2525 = vcombine.high %v2505, %v2521
    %2528 = vrot.lane.b32.xlu0 %v2455, 32
    %v2529 = vpop.permute.xlu0 %2528
    %2530 = vrot.lane.b32.xlu0 %v2523, 32
    %v2531 = vpop.permute.xlu0 %2530
    %2536 = vrot.lane.b32.xlu0 %v2456, 64
    %v2537 = vpop.permute.xlu0 %2536
    %2538 = vrot.lane.b32.xlu0 %v2524, 64
    %v2539 = vpop.permute.xlu0 %2538
    %2544 = vrot.lane.b32.xlu0 %v2457, 96
    %v2545 = vpop.permute.xlu0 %2544
    %2546 = vrot.lane.b32.xlu0 %v2525, 96
    %v2547 = vpop.permute.xlu0 %2546
    %v2550 = vsel %vm1493, %v2454, %v2529
    %v2551 = vsel %vm1493, %v2522, %v2531
    %vm2552 = vcmask 523264
    %v2553 = vsel %vm2552, %v2550, %v2537
    %v2554 = vsel %vm2552, %v2551, %v2539
    %vm2555 = vcmask 785408
    %v2556 = vsel %vm2555, %v2553, %v2545
    %v2557 = vsel %vm2555, %v2554, %v2547
    %v2558 = vpack.c.bf16 %v2557, %v2556
    %v2559 = vld [vmem:[#allocation11] sm:$0xf]
    %v2560 = vld [vmem:[#allocation11 + $0x4] sm:$0xf]
    %v2561 = vld [vmem:[#allocation11 + $0x8] sm:$0xf]
    %v2562 = vld [vmem:[#allocation11 + $0xc] sm:$0xf]
    %v2563 = vld [vmem:[#allocation11 + $0x10] sm:$0xf]
    %v2564 = vld [vmem:[#allocation11 + $0x14] sm:$0xf]
    %v2565 = vld [vmem:[#allocation11 + $0x18] sm:$0xf]
    %v2566 = vld [vmem:[#allocation11 + $0x1c] sm:$0xf]
    %v2567 = vld [vmem:[#allocation11 + $0x20] sm:$0xf]
    %v2568 = vld [vmem:[#allocation11 + $0x24] sm:$0xf]
    %v2569 = vld [vmem:[#allocation11 + $0x28] sm:$0xf]
    %v2570 = vld [vmem:[#allocation11 + $0x2c] sm:$0xf]
    %v2571 = vld [vmem:[#allocation11 + $0x30] sm:$0xf]
    %v2572 = vld [vmem:[#allocation11 + $0x34] sm:$0xf]
    %v2573 = vld [vmem:[#allocation11 + $0x38] sm:$0xf]
    %v2574 = vld [vmem:[#allocation11 + $0x3c] sm:$0xf]
    %v2591 = vunpack.c.l.b16 %v2559
    %v2592 = vunpack.c.l.b16 %v2560
    %v2593 = vunpack.c.l.b16 %v2561
    %v2594 = vunpack.c.l.b16 %v2562
    %v2595 = vunpack.c.l.b16 %v2563
    %v2596 = vunpack.c.l.b16 %v2564
    %v2597 = vunpack.c.l.b16 %v2565
    %v2598 = vunpack.c.l.b16 %v2566
    %v2599 = vunpack.c.l.b16 %v2567
    %v2600 = vunpack.c.l.b16 %v2568
    %v2601 = vunpack.c.l.b16 %v2569
    %v2602 = vunpack.c.l.b16 %v2570
    %v2603 = vunpack.c.l.b16 %v2571
    %v2604 = vunpack.c.l.b16 %v2572
    %v2605 = vunpack.c.l.b16 %v2573
    %v2606 = vunpack.c.l.b16 %v2574
    %v2607 = vpack.c.b16 %v2592, %v2591
    %v2608 = vpack.c.b16 %v2594, %v2593
    %v2609 = vpack.c.b16 %v2596, %v2595
    %v2610 = vpack.c.b16 %v2598, %v2597
    %v2611 = vpack.c.b16 %v2600, %v2599
    %v2612 = vpack.c.b16 %v2602, %v2601
    %v2613 = vpack.c.b16 %v2604, %v2603
    %v2614 = vpack.c.b16 %v2606, %v2605
    %2623 = vmatprep.subr.bf16.mxu0 0
    %2624 = vmatpush1.bf16.msra.mxu0 %v2607
    %2625 = vmatprep.subr.bf16.mxu0 0
    %2626 = vmatpush1.bf16.msra.mxu0 %v2608
    %2627 = vmatprep.subr.bf16.mxu0 0
    %2628 = vmatpush1.bf16.msra.mxu0 %v2609
    %2629 = vmatprep.subr.bf16.mxu0 0
    %2630 = vmatpush1.bf16.msra.mxu0 %v2610
    %2631 = vmatprep.subr.bf16.mxu0 0
    %2632 = vmatpush1.bf16.msra.mxu0 %v2611
    %2633 = vmatprep.subr.bf16.mxu0 0
    %2634 = vmatpush1.bf16.msra.mxu0 %v2612
    %2635 = vmatprep.subr.bf16.mxu0 0
    %2636 = vmatpush1.bf16.msra.mxu0 %v2613
    %2637 = vmatprep.subr.bf16.mxu0 0
    %2638 = vmatpush1.bf16.msra.mxu0 %v2614
    %2639 = vmatprep.subr.bf16.mxu0 0
    %2640 = vmatpush1.bf16.msra.mxu0 0
    %2641 = vmatprep.subr.bf16.mxu0 0
    %2642 = vmatpush1.bf16.msra.mxu0 0
    %2643 = vmatprep.subr.bf16.mxu0 0
    %2644 = vmatpush1.bf16.msra.mxu0 0
    %2645 = vmatprep.subr.bf16.mxu0 0
    %2646 = vmatpush1.bf16.msra.mxu0 0
    %2647 = vmatprep.subr.bf16.mxu0 0
    %2648 = vmatpush1.bf16.msra.mxu0 0
    %2649 = vmatprep.subr.bf16.mxu0 0
    %2650 = vmatpush1.bf16.msra.mxu0 0
    %2651 = vmatprep.subr.bf16.mxu0 0
    %2652 = vmatpush1.bf16.msra.mxu0 0
    %2653 = vmatprep.subr.bf16.mxu0 0
    %2654 = vmatpush1.bf16.msra.mxu0 0
    %2655 = vmatprep.mubr.bf16.mxu0 0
    %2656 = vmatmul.mubr.bf16.gmra.mrb[0].mxu0 %v2558
    %v2657 = vpop.f32.mrb[0].mxu0
    %v2658 = vadd.f32 0.0, %v2657
    %v2659 = vpop.f32.mrb[0].mxu0
    %v2660 = vpop.f32.mrb[0].mxu0
    %v2661 = vadd.f32 0.0, %v2660
    %v2662 = vpop.f32.mrb[0].mxu0
    %2663 = vdwg.mxu0
    %v2664 = vadd.f32 %v140, %v2658
    %v2665 = vadd.f32 %v141, %v2661
    %v2666 = vmul.f32 %v2664, %v2664
    %v2667 = vmul.f32 %v2665, %v2665
    %2668 = vadd.xlane.f32.xlu0 %v2666
    %v2669 = vpop.xlane.xlu0 %2668
    %2670 = vadd.xlane.f32.xlu0 %v2667
    %v2671 = vpop.xlane.xlu0 %2670
    %v2672 = vmul.f32 %v2669, %v148
    %v2673 = vmul.f32 %v2671, %v148
    %v2674 = vadd.f32 %v2672, 1e-06
    %v2675 = vadd.f32 %v2673, 1e-06
    %v2676 = vrsqrt.pop %v2674
    %v2677 = vrsqrt.pop %v2675
    %v2678 = vmul.f32 %v2664, %v2676
    %v2679 = vmul.f32 %v2665, %v2677
    %v2680 = vpack.c.bf16 %v2679, %v2678
    %v2681 = vld [vmem:[#allocation13] sm:$0xff]
    %v2682 = vld [vmem:[#allocation13 + $0x8] sm:$0xff]
    %v2683 = vld [vmem:[#allocation13 + $0x10] sm:$0xff]
    %v2684 = vld [vmem:[#allocation13 + $0x18] sm:$0xff]
    %v2685 = vld [vmem:[#allocation13 + $0x20] sm:$0xff]
    %v2686 = vld [vmem:[#allocation13 + $0x28] sm:$0xff]
    %v2687 = vld [vmem:[#allocation13 + $0x30] sm:$0xff]
    %v2688 = vld [vmem:[#allocation13 + $0x38] sm:$0xff]
    %v2689 = vld [vmem:[#allocation13 + $0x40] sm:$0xff]
    %v2690 = vld [vmem:[#allocation13 + $0x48] sm:$0xff]
    %v2691 = vld [vmem:[#allocation13 + $0x50] sm:$0xff]
    %v2692 = vld [vmem:[#allocation13 + $0x58] sm:$0xff]
    %v2693 = vld [vmem:[#allocation13 + $0x60] sm:$0xff]
    %v2694 = vld [vmem:[#allocation13 + $0x68] sm:$0xff]
    %v2695 = vld [vmem:[#allocation13 + $0x70] sm:$0xff]
    %v2696 = vld [vmem:[#allocation13 + $0x78] sm:$0xff]
    %v2697 = vld [vmem:[#allocation13 + $0x80] sm:$0xff]
    %v2698 = vld [vmem:[#allocation13 + $0x88] sm:$0xff]
    %v2699 = vld [vmem:[#allocation13 + $0x90] sm:$0xff]
    %v2700 = vld [vmem:[#allocation13 + $0x98] sm:$0xff]
    %v2701 = vld [vmem:[#allocation13 + $0xa0] sm:$0xff]
    %v2702 = vld [vmem:[#allocation13 + $0xa8] sm:$0xff]
    %v2703 = vld [vmem:[#allocation13 + $0xb0] sm:$0xff]
    %v2704 = vld [vmem:[#allocation13 + $0xb8] sm:$0xff]
    %v2705 = vld [vmem:[#allocation13 + $0xc0] sm:$0xff]
    %v2706 = vld [vmem:[#allocation13 + $0xc8] sm:$0xff]
    %v2707 = vld [vmem:[#allocation13 + $0xd0] sm:$0xff]
    %v2708 = vld [vmem:[#allocation13 + $0xd8] sm:$0xff]
    %v2709 = vld [vmem:[#allocation13 + $0xe0] sm:$0xff]
    %v2710 = vld [vmem:[#allocation13 + $0xe8] sm:$0xff]
    %v2711 = vld [vmem:[#allocation13 + $0xf0] sm:$0xff]
    %v2712 = vld [vmem:[#allocation13 + $0xf8] sm:$0xff]
    %v2745 = vunpack.c.l.b16 %v2681
    %v2746 = vunpack.c.h.b16 %v2681
    %v2747 = vunpack.c.l.b16 %v2682
    %v2748 = vunpack.c.h.b16 %v2682
    %v2749 = vunpack.c.l.b16 %v2683
    %v2750 = vunpack.c.h.b16 %v2683
    %v2751 = vunpack.c.l.b16 %v2684
    %v2752 = vunpack.c.h.b16 %v2684
    %v2753 = vunpack.c.l.b16 %v2685
    %v2754 = vunpack.c.h.b16 %v2685
    %v2755 = vunpack.c.l.b16 %v2686
    %v2756 = vunpack.c.h.b16 %v2686
    %v2757 = vunpack.c.l.b16 %v2687
    %v2758 = vunpack.c.h.b16 %v2687
    %v2759 = vunpack.c.l.b16 %v2688
    %v2760 = vunpack.c.h.b16 %v2688
    %v2761 = vunpack.c.l.b16 %v2689
    %v2762 = vunpack.c.h.b16 %v2689
    %v2763 = vunpack.c.l.b16 %v2690
    %v2764 = vunpack.c.h.b16 %v2690
    %v2765 = vunpack.c.l.b16 %v2691
    %v2766 = vunpack.c.h.b16 %v2691
    %v2767 = vunpack.c.l.b16 %v2692
    %v2768 = vunpack.c.h.b16 %v2692
    %v2769 = vunpack.c.l.b16 %v2693
    %v2770 = vunpack.c.h.b16 %v2693
    %v2771 = vunpack.c.l.b16 %v2694
    %v2772 = vunpack.c.h.b16 %v2694
    %v2773 = vunpack.c.l.b16 %v2695
    %v2774 = vunpack.c.h.b16 %v2695
    %v2775 = vunpack.c.l.b16 %v2696
    %v2776 = vunpack.c.h.b16 %v2696
    %v2777 = vunpack.c.l.b16 %v2697
    %v2778 = vunpack.c.h.b16 %v2697
    %v2779 = vunpack.c.l.b16 %v2698
    %v2780 = vunpack.c.h.b16 %v2698
    %v2781 = vunpack.c.l.b16 %v2699
    %v2782 = vunpack.c.h.b16 %v2699
    %v2783 = vunpack.c.l.b16 %v2700
    %v2784 = vunpack.c.h.b16 %v2700
    %v2785 = vunpack.c.l.b16 %v2701
    %v2786 = vunpack.c.h.b16 %v2701
    %v2787 = vunpack.c.l.b16 %v2702
    %v2788 = vunpack.c.h.b16 %v2702
    %v2789 = vunpack.c.l.b16 %v2703
    %v2790 = vunpack.c.h.b16 %v2703
    %v2791 = vunpack.c.l.b16 %v2704
    %v2792 = vunpack.c.h.b16 %v2704
    %v2793 = vunpack.c.l.b16 %v2705
    %v2794 = vunpack.c.h.b16 %v2705
    %v2795 = vunpack.c.l.b16 %v2706
    %v2796 = vunpack.c.h.b16 %v2706
    %v2797 = vunpack.c.l.b16 %v2707
    %v2798 = vunpack.c.h.b16 %v2707
    %v2799 = vunpack.c.l.b16 %v2708
    %v2800 = vunpack.c.h.b16 %v2708
    %v2801 = vunpack.c.l.b16 %v2709
    %v2802 = vunpack.c.h.b16 %v2709
    %v2803 = vunpack.c.l.b16 %v2710
    %v2804 = vunpack.c.h.b16 %v2710
    %v2805 = vunpack.c.l.b16 %v2711
    %v2806 = vunpack.c.h.b16 %v2711
    %v2807 = vunpack.c.l.b16 %v2712
    %v2808 = vunpack.c.h.b16 %v2712
    %v2809 = vpack.c.b16 %v2749, %v2745
    %v2810 = vpack.c.b16 %v2750, %v2746
    %v2811 = vpack.c.b16 %v2751, %v2747
    %v2812 = vpack.c.b16 %v2752, %v2748
    %v2813 = vpack.c.b16 %v2757, %v2753
    %v2814 = vpack.c.b16 %v2758, %v2754
    %v2815 = vpack.c.b16 %v2759, %v2755
    %v2816 = vpack.c.b16 %v2760, %v2756
    %v2817 = vpack.c.b16 %v2765, %v2761
    %v2818 = vpack.c.b16 %v2766, %v2762
    %v2819 = vpack.c.b16 %v2767, %v2763
    %v2820 = vpack.c.b16 %v2768, %v2764
    %v2821 = vpack.c.b16 %v2773, %v2769
    %v2822 = vpack.c.b16 %v2774, %v2770
    %v2823 = vpack.c.b16 %v2775, %v2771
    %v2824 = vpack.c.b16 %v2776, %v2772
    %v2825 = vpack.c.b16 %v2781, %v2777
    %v2826 = vpack.c.b16 %v2782, %v2778
    %v2827 = vpack.c.b16 %v2783, %v2779
    %v2828 = vpack.c.b16 %v2784, %v2780
    %v2829 = vpack.c.b16 %v2789, %v2785
    %v2830 = vpack.c.b16 %v2790, %v2786
    %v2831 = vpack.c.b16 %v2791, %v2787
    %v2832 = vpack.c.b16 %v2792, %v2788
    %v2833 = vpack.c.b16 %v2797, %v2793
    %v2834 = vpack.c.b16 %v2798, %v2794
    %v2835 = vpack.c.b16 %v2799, %v2795
    %v2836 = vpack.c.b16 %v2800, %v2796
    %v2837 = vpack.c.b16 %v2805, %v2801
    %v2838 = vpack.c.b16 %v2806, %v2802
    %v2839 = vpack.c.b16 %v2807, %v2803
    %v2840 = vpack.c.b16 %v2808, %v2804
    %2873 = vmatprep.subr.bf16.mxu0 %v2810
    %2874 = vmatpush1.bf16.msra.mxu0 %v2809
    %2875 = vmatprep.subr.bf16.mxu0 %v2814
    %2876 = vmatpush1.bf16.msra.mxu0 %v2813
    %2877 = vmatprep.subr.bf16.mxu0 %v2818
    %2878 = vmatpush1.bf16.msra.mxu0 %v2817
    %2879 = vmatprep.subr.bf16.mxu0 %v2822
    %2880 = vmatpush1.bf16.msra.mxu0 %v2821
    %2881 = vmatprep.subr.bf16.mxu0 %v2826
    %2882 = vmatpush1.bf16.msra.mxu0 %v2825
    %2883 = vmatprep.subr.bf16.mxu0 %v2830
    %2884 = vmatpush1.bf16.msra.mxu0 %v2829
    %2885 = vmatprep.subr.bf16.mxu0 %v2834
    %2886 = vmatpush1.bf16.msra.mxu0 %v2833
    %2887 = vmatprep.subr.bf16.mxu0 %v2838
    %2888 = vmatpush1.bf16.msra.mxu0 %v2837
    %2889 = vmatprep.subr.bf16.mxu0 0
    %2890 = vmatpush1.bf16.msra.mxu0 0
    %2891 = vmatprep.subr.bf16.mxu0 0
    %2892 = vmatpush1.bf16.msra.mxu0 0
    %2893 = vmatprep.subr.bf16.mxu0 0
    %2894 = vmatpush1.bf16.msra.mxu0 0
    %2895 = vmatprep.subr.bf16.mxu0 0
    %2896 = vmatpush1.bf16.msra.mxu0 0
    %2897 = vmatprep.subr.bf16.mxu0 0
    %2898 = vmatpush1.bf16.msra.mxu0 0
    %2899 = vmatprep.subr.bf16.mxu0 0
    %2900 = vmatpush1.bf16.msra.mxu0 0
    %2901 = vmatprep.subr.bf16.mxu0 0
    %2902 = vmatpush1.bf16.msra.mxu0 0
    %2903 = vmatprep.subr.bf16.mxu0 0
    %2904 = vmatpush1.bf16.msra.mxu0 0
    %2905 = vmatprep.mubr.bf16.mxu0 0
    %2906 = vmatmul.mubr.bf16.gmra.mrb[0].mxu0 %v2680
    %v2907 = vpop.f32.mrb[0].mxu0
    %v2908 = vadd.f32 0.0, %v2907
    %v2909 = vpop.f32.mrb[0].mxu0
    %v2910 = vadd.f32 0.0, %v2909
    %v2911 = vpop.f32.mrb[0].mxu0
    %v2912 = vadd.f32 0.0, %v2911
    %v2913 = vpop.f32.mrb[0].mxu0
    %v2914 = vadd.f32 0.0, %v2913
    %2915 = vdwg.mxu0
    %2916 = vmatprep.subr.bf16.mxu0 %v2812
    %2917 = vmatpush1.bf16.msra.mxu0 %v2811
    %2918 = vmatprep.subr.bf16.mxu0 %v2816
    %2919 = vmatpush1.bf16.msra.mxu0 %v2815
    %2920 = vmatprep.subr.bf16.mxu0 %v2820
    %2921 = vmatpush1.bf16.msra.mxu0 %v2819
    %2922 = vmatprep.subr.bf16.mxu0 %v2824
    %2923 = vmatpush1.bf16.msra.mxu0 %v2823
    %2924 = vmatprep.subr.bf16.mxu0 %v2828
    %2925 = vmatpush1.bf16.msra.mxu0 %v2827
    %2926 = vmatprep.subr.bf16.mxu0 %v2832
    %2927 = vmatpush1.bf16.msra.mxu0 %v2831
    %2928 = vmatprep.subr.bf16.mxu0 %v2836
    %2929 = vmatpush1.bf16.msra.mxu0 %v2835
    %2930 = vmatprep.subr.bf16.mxu0 %v2840
    %2931 = vmatpush1.bf16.msra.mxu0 %v2839
    %2932 = vmatprep.subr.bf16.mxu0 0
    %2933 = vmatpush1.bf16.msra.mxu0 0
    %2934 = vmatprep.subr.bf16.mxu0 0
    %2935 = vmatpush1.bf16.msra.mxu0 0
    %2936 = vmatprep.subr.bf16.mxu0 0
    %2937 = vmatpush1.bf16.msra.mxu0 0
    %2938 = vmatprep.subr.bf16.mxu0 0
    %2939 = vmatpush1.bf16.msra.mxu0 0
    %2940 = vmatprep.subr.bf16.mxu0 0
    %2941 = vmatpush1.bf16.msra.mxu0 0
    %2942 = vmatprep.subr.bf16.mxu0 0
    %2943 = vmatpush1.bf16.msra.mxu0 0
    %2944 = vmatprep.subr.bf16.mxu0 0
    %2945 = vmatpush1.bf16.msra.mxu0 0
    %2946 = vmatprep.subr.bf16.mxu0 0
    %2947 = vmatpush1.bf16.msra.mxu0 0
    %2948 = vmatprep.mubr.bf16.mxu0 0
    %2949 = vmatmul.mubr.bf16.gmra.mrb[0].mxu0 %v2680
    %v2950 = vpop.f32.mrb[0].mxu0
    %v2951 = vadd.f32 0.0, %v2950
    %v2952 = vpop.f32.mrb[0].mxu0
    %v2953 = vadd.f32 0.0, %v2952
    %v2954 = vpop.f32.mrb[0].mxu0
    %v2955 = vadd.f32 0.0, %v2954
    %v2956 = vpop.f32.mrb[0].mxu0
    %v2957 = vadd.f32 0.0, %v2956
    %2958 = vdwg.mxu0
    %v2959 = vxor.u32 %v2908, 2147483648
    %v2960 = vxor.u32 %v2910, 2147483648
    %v2961 = vxor.u32 %v2912, 2147483648
    %v2962 = vxor.u32 %v2914, 2147483648
    %v2963 = vmul.f32 %v2959, 1.442695
    %v2964 = vpow.pop %v2963
    %v2965 = vmul.f32 %v2960, 1.442695
    %v2966 = vpow.pop %v2965
    %v2967 = vmul.f32 %v2961, 1.442695
    %v2968 = vpow.pop %v2967
    %v2969 = vmul.f32 %v2962, 1.442695
    %v2970 = vpow.pop %v2969
    %v2971 = vadd.f32 %v2964, 1.0
    %v2972 = vadd.f32 %v2966, 1.0
    %v2973 = vadd.f32 %v2968, 1.0
    %v2974 = vadd.f32 %v2970, 1.0
    %v2975 = vrcp.pop %v2971
    %v2976 = vmul.f32 1.0, %v2975
    %v2977 = vrcp.pop %v2972
    %v2978 = vmul.f32 1.0, %v2977
    %v2979 = vrcp.pop %v2973
    %v2980 = vmul.f32 1.0, %v2979
    %v2981 = vrcp.pop %v2974
    %v2982 = vmul.f32 1.0, %v2981
    %v2983 = vmul.f32 %v2908, %v2976
    %v2984 = vmul.f32 %v2910, %v2978
    %v2985 = vmul.f32 %v2912, %v2980
    %v2986 = vmul.f32 %v2914, %v2982
    %v2987 = vmul.f32 %v2983, %v2951
    %v2988 = vmul.f32 %v2984, %v2953
    %v2989 = vmul.f32 %v2985, %v2955
    %v2990 = vmul.f32 %v2986, %v2957
    %v2991 = vpack.c.bf16 %v2989, %v2987
    %v2992 = vpack.c.bf16 %v2990, %v2988
    %v2993 = vld [vmem:[#allocation14] sm:$0xf]
    %v2994 = vld [vmem:[#allocation14 + $0x4] sm:$0xf]
    %v2995 = vld [vmem:[#allocation14 + $0x8] sm:$0xf]
    %v2996 = vld [vmem:[#allocation14 + $0xc] sm:$0xf]
    %v2997 = vld [vmem:[#allocation14 + $0x10] sm:$0xf]
    %v2998 = vld [vmem:[#allocation14 + $0x14] sm:$0xf]
    %v2999 = vld [vmem:[#allocation14 + $0x18] sm:$0xf]
    %v3000 = vld [vmem:[#allocation14 + $0x1c] sm:$0xf]
    %v3001 = vld [vmem:[#allocation14 + $0x20] sm:$0xf]
    %v3002 = vld [vmem:[#allocation14 + $0x24] sm:$0xf]
    %v3003 = vld [vmem:[#allocation14 + $0x28] sm:$0xf]
    %v3004 = vld [vmem:[#allocation14 + $0x2c] sm:$0xf]
    %v3005 = vld [vmem:[#allocation14 + $0x30] sm:$0xf]
    %v3006 = vld [vmem:[#allocation14 + $0x34] sm:$0xf]
    %v3007 = vld [vmem:[#allocation14 + $0x38] sm:$0xf]
    %v3008 = vld [vmem:[#allocation14 + $0x3c] sm:$0xf]
    %v3009 = vld [vmem:[#allocation14 + $0x40] sm:$0xf]
    %v3010 = vld [vmem:[#allocation14 + $0x44] sm:$0xf]
    %v3011 = vld [vmem:[#allocation14 + $0x48] sm:$0xf]
    %v3012 = vld [vmem:[#allocation14 + $0x4c] sm:$0xf]
    %v3013 = vld [vmem:[#allocation14 + $0x50] sm:$0xf]
    %v3014 = vld [vmem:[#allocation14 + $0x54] sm:$0xf]
    %v3015 = vld [vmem:[#allocation14 + $0x58] sm:$0xf]
    %v3016 = vld [vmem:[#allocation14 + $0x5c] sm:$0xf]
    %v3017 = vld [vmem:[#allocation14 + $0x60] sm:$0xf]
    %v3018 = vld [vmem:[#allocation14 + $0x64] sm:$0xf]
    %v3019 = vld [vmem:[#allocation14 + $0x68] sm:$0xf]
    %v3020 = vld [vmem:[#allocation14 + $0x6c] sm:$0xf]
    %v3021 = vld [vmem:[#allocation14 + $0x70] sm:$0xf]
    %v3022 = vld [vmem:[#allocation14 + $0x74] sm:$0xf]
    %v3023 = vld [vmem:[#allocation14 + $0x78] sm:$0xf]
    %v3024 = vld [vmem:[#allocation14 + $0x7c] sm:$0xf]
    %v3057 = vunpack.c.l.b16 %v2993
    %v3058 = vunpack.c.l.b16 %v2994
    %v3059 = vunpack.c.l.b16 %v2995
    %v3060 = vunpack.c.l.b16 %v2996
    %v3061 = vunpack.c.l.b16 %v2997
    %v3062 = vunpack.c.l.b16 %v2998
    %v3063 = vunpack.c.l.b16 %v2999
    %v3064 = vunpack.c.l.b16 %v3000
    %v3065 = vunpack.c.l.b16 %v3001
    %v3066 = vunpack.c.l.b16 %v3002
    %v3067 = vunpack.c.l.b16 %v3003
    %v3068 = vunpack.c.l.b16 %v3004
    %v3069 = vunpack.c.l.b16 %v3005
    %v3070 = vunpack.c.l.b16 %v3006
    %v3071 = vunpack.c.l.b16 %v3007
    %v3072 = vunpack.c.l.b16 %v3008
    %v3073 = vunpack.c.l.b16 %v3009
    %v3074 = vunpack.c.l.b16 %v3010
    %v3075 = vunpack.c.l.b16 %v3011
    %v3076 = vunpack.c.l.b16 %v3012
    %v3077 = vunpack.c.l.b16 %v3013
    %v3078 = vunpack.c.l.b16 %v3014
    %v3079 = vunpack.c.l.b16 %v3015
    %v3080 = vunpack.c.l.b16 %v3016
    %v3081 = vunpack.c.l.b16 %v3017
    %v3082 = vunpack.c.l.b16 %v3018
    %v3083 = vunpack.c.l.b16 %v3019
    %v3084 = vunpack.c.l.b16 %v3020
    %v3085 = vunpack.c.l.b16 %v3021
    %v3086 = vunpack.c.l.b16 %v3022
    %v3087 = vunpack.c.l.b16 %v3023
    %v3088 = vunpack.c.l.b16 %v3024
    %v3089 = vpack.c.b16 %v3058, %v3057
    %v3090 = vpack.c.b16 %v3060, %v3059
    %v3091 = vpack.c.b16 %v3062, %v3061
    %v3092 = vpack.c.b16 %v3064, %v3063
    %v3093 = vpack.c.b16 %v3066, %v3065
    %v3094 = vpack.c.b16 %v3068, %v3067
    %v3095 = vpack.c.b16 %v3070, %v3069
    %v3096 = vpack.c.b16 %v3072, %v3071
    %v3097 = vpack.c.b16 %v3074, %v3073
    %v3098 = vpack.c.b16 %v3076, %v3075
    %v3099 = vpack.c.b16 %v3078, %v3077
    %v3100 = vpack.c.b16 %v3080, %v3079
    %v3101 = vpack.c.b16 %v3082, %v3081
    %v3102 = vpack.c.b16 %v3084, %v3083
    %v3103 = vpack.c.b16 %v3086, %v3085
    %v3104 = vpack.c.b16 %v3088, %v3087
    %3121 = vmatprep.subr.bf16.mxu0 0
    %3122 = vmatpush1.bf16.msra.mxu0 %v3089
    %3123 = vmatprep.subr.bf16.mxu0 0
    %3124 = vmatpush1.bf16.msra.mxu0 %v3090
    %3125 = vmatprep.subr.bf16.mxu0 0
    %3126 = vmatpush1.bf16.msra.mxu0 %v3091
    %3127 = vmatprep.subr.bf16.mxu0 0
    %3128 = vmatpush1.bf16.msra.mxu0 %v3092
    %3129 = vmatprep.subr.bf16.mxu0 0
    %3130 = vmatpush1.bf16.msra.mxu0 %v3093
    %3131 = vmatprep.subr.bf16.mxu0 0
    %3132 = vmatpush1.bf16.msra.mxu0 %v3094
    %3133 = vmatprep.subr.bf16.mxu0 0
    %3134 = vmatpush1.bf16.msra.mxu0 %v3095
    %3135 = vmatprep.subr.bf16.mxu0 0
    %3136 = vmatpush1.bf16.msra.mxu0 %v3096
    %3137 = vmatprep.subr.bf16.mxu0 0
    %3138 = vmatpush1.bf16.msra.mxu0 %v3097
    %3139 = vmatprep.subr.bf16.mxu0 0
    %3140 = vmatpush1.bf16.msra.mxu0 %v3098
    %3141 = vmatprep.subr.bf16.mxu0 0
    %3142 = vmatpush1.bf16.msra.mxu0 %v3099
    %3143 = vmatprep.subr.bf16.mxu0 0
    %3144 = vmatpush1.bf16.msra.mxu0 %v3100
    %3145 = vmatprep.subr.bf16.mxu0 0
    %3146 = vmatpush1.bf16.msra.mxu0 %v3101
    %3147 = vmatprep.subr.bf16.mxu0 0
    %3148 = vmatpush1.bf16.msra.mxu0 %v3102
    %3149 = vmatprep.subr.bf16.mxu0 0
    %3150 = vmatpush1.bf16.msra.mxu0 %v3103
    %3151 = vmatprep.subr.bf16.mxu0 0
    %3152 = vmatpush1.bf16.msra.mxu0 %v3104
    %3153 = vmatprep.mubr.bf16.mxu0 %v2992
    %3154 = vmatmul.mubr.bf16.gmra.mrb[0].mxu0 %v2991
    %v3155 = vpop.f32.mrb[0].mxu0
    %v3156 = vadd.f32 0.0, %v3155
    %v3157 = vpop.f32.mrb[0].mxu0
    %v3158 = vpop.f32.mrb[0].mxu0
    %v3159 = vadd.f32 0.0, %v3158
    %v3160 = vpop.f32.mrb[0].mxu0
    %3161 = vdwg.mxu0
    %v3162 = vadd.f32 %v2664, %v3156
    %v3163 = vadd.f32 %v2665, %v3159
    %3164 = vst [vmem:[#allocation16] sm:$0xff] %v3162
    %3165 = vst [vmem:[#allocation16 + $0x8] sm:$0xff] %v3163
    // Predicated region
    $region66: #{tpu_custom_call.1} parent=1 // pred_check
      _
    $region67: #{tpu_custom_call.1} parent=1 // pred_check_branch
      %3167 = sbr.rel (0) target = $region69
    $region68: #{tpu_custom_call.1} parent=1 // pred_region
      %s3169 = ssub.s32 256, 256
      %3170 = vsyncadd [#allocation4], %s3169
      %s3171 = sshll.u32 [#allocation16], 4
      %s3172 = int_to_ptr.vmem [resolvable:$true] %s3171
      %3177 = dma.vmem_to_hbm [thread:$0]  %s3172, 256, %s8, [#allocation4], 128, 128, 8
    $region69: #{tpu_custom_call.1} parent=1 // pred_fallthru
      _
    // Predicated region
    $region70: #{tpu_custom_call.1} parent=1 // pred_check
      _
    $region71: #{tpu_custom_call.1} parent=1 // pred_check_branch
      %3179 = sbr.rel (0) target = $region73
    $region72: #{tpu_custom_call.1} parent=1 // pred_region
      %3180 = dma.done [#allocation4], 256
    $region73: #{tpu_custom_call.1} parent=1 // pred_fallthru
      _
    %3181 = vsyncpa [#allocation3], 1
    %3182 = vsyncpa [#allocation6], 1
    %3183 = vsyncpa [#allocation9], 1
    %3184 = vsyncpa [#allocation12], 1
    %3185 = vsyncpa [#allocation15], 1
    %3186 = vsyncpa [#allocation4], 1

</llo_original>
